<compile_context>
chip_gen: v7x
topology: tpu7x:2x2x1
jax: 0.10.0
libtpu: 0.0.40
codegen_flags: <defaults>
</compile_context>

<pallas_src>
import jax
import jax.numpy as jnp
from jax import lax
from jax.experimental import pallas as pl
from jax.experimental.pallas import tpu as pltpu

EPS = 1e-5


def _fused_kernel(x_ref, scale_ref, w_ref, gamma_ref, beta_ref, o_ref, acc_ref):
    # x_ref:     (tk, P)      streamed activation chunk (Cin tile on sublanes)
    # scale_ref: (tk, 1)      per-input-channel multiplier chunk
    # w_ref:     (tk, Cout)   weight chunk (Cin on sublanes, Cout full on lanes)
    # gamma_ref: (Cout, 1)
    # beta_ref:  (Cout, 1)
    # o_ref:     (Cout, P)    resident output block (written only on last step)
    # acc_ref:   (Cout, P)    f32 accumulator scratch (persists across grid steps)
    k = pl.program_id(0)
    nk = pl.num_programs(0)

    @pl.when(k == 0)
    def _init():
        acc_ref[...] = jnp.zeros_like(acc_ref)

    # Fold the per-input-channel scale into the small weight slab so the larger
    # streamed operand (x) goes to the MXU untouched.
    w_scaled = w_ref[...] * scale_ref[...]                      # (tk, Cout)

    # Partial 1x1 conv: contract the Cin tile of both operands (transposed-LHS
    # matmul), accumulate in f32.  (tk,Cout) x (tk,P) -> (Cout,P).
    acc_ref[...] += lax.dot_general(
        w_scaled, x_ref[...],
        dimension_numbers=(((0,), (0,)), ((), ())),
        preferred_element_type=jnp.float32)

    @pl.when(k == nk - 1)
    def _epilogue():
        y = acc_ref[...]                                        # (Cout, P) f32
        inv_p = 1.0 / y.shape[1]
        # One-pass batch statistics as cheap lane reductions (XLU), no MXU matvecs.
        s1 = jnp.sum(y, axis=-1, keepdims=True)                 # (Cout, 1)
        s2 = jnp.sum(y * y, axis=-1, keepdims=True)             # (Cout, 1)
        mean = s1 * inv_p
        var = jnp.maximum(s2 * inv_p - mean * mean, 0.0)        # guard tiny negatives
        # Fold normalize + affine into one per-channel FMA over y.
        a = gamma_ref[...] * lax.rsqrt(var + EPS)               # (Cout, 1)
        b = beta_ref[...] - mean * a                            # (Cout, 1)
        o_ref[...] = y * a + b


def fused_mul_conv1x1_bn(x_nchw, scale_nc11, weight_io, gamma, beta, *, tk=320):
    """x_nchw: (N, Cin, H, W); scale_nc11: (N, Cin, 1, 1);
    weight_io: (Cin, Cout)  -- PyTorch Conv2d weight (Cout,Cin,1,1) transposed once
    at load time; gamma/beta: (Cout,).  Returns (N, Cout, H, W), training-mode BN."""
    n, cin, h, w = x_nchw.shape
    cin_w, cout = weight_io.shape
    assert cin_w == cin, (cin_w, cin)
    if n != 1:
        # TODO(synk): generalize to N > 1 (per-sample scale can no longer be folded
        # into the weight; it would have to be applied to x per sample).
        raise NotImplementedError("kernel assumes N == 1 (as in the module spec)")
    p = n * h * w

    # Cin reduction tile: must divide Cin and be a multiple of 8 (sublane axis).
    if cin % tk != 0 or tk % 8 != 0:
        tk = cin                       # fallback: single step, no pipelining
    nk = cin // tk

    # Pure reshapes only -- no transposes, no extra HBM round-trips.
    x_cp = x_nchw.reshape(cin, p)              # (Cin, P)
    scale_c1 = scale_nc11.reshape(cin, 1)      # (Cin, 1)
    gamma_c1 = gamma.reshape(cout, 1)          # (Cout, 1)
    beta_c1 = beta.reshape(cout, 1)            # (Cout, 1)

    cost = pl.CostEstimate(
        flops=2 * p * cin * cout + 6 * p * cout,           # conv matmul + BN epilogue
        transcendentals=cout,                              # rsqrt per channel
        bytes_accessed=4 * (cin * p + cin * cout + cout * p + cin + 2 * cout),
    )

    grid_spec = pltpu.PrefetchScalarGridSpec(
        num_scalar_prefetch=0,
        grid=(nk,),
        in_specs=[
            pl.BlockSpec((tk, p), lambda k: (k, 0)),        # x chunk (streamed)
            pl.BlockSpec((tk, 1), lambda k: (k, 0)),        # scale chunk
            pl.BlockSpec((tk, cout), lambda k: (k, 0)),     # weight chunk (streamed)
            pl.BlockSpec((cout, 1), lambda k: (0, 0)),      # gamma (resident)
            pl.BlockSpec((cout, 1), lambda k: (0, 0)),      # beta (resident)
        ],
        out_specs=pl.BlockSpec((cout, p), lambda k: (0, 0)),   # resident across k
        scratch_shapes=[pltpu.VMEM((cout, p), jnp.float32)],   # f32 accumulator
    )

    out_cp = pl.pallas_call(
        _fused_kernel,
        out_shape=jax.ShapeDtypeStruct((cout, p), jnp.float32),
        grid_spec=grid_spec,
        compiler_params=pltpu.CompilerParams(dimension_semantics=("arbitrary",)),
        cost_estimate=cost,
    )(x_cp, scale_c1, weight_io, gamma_c1, beta_c1)

    # (Cout, P) -> (N, Cout, H, W): pure reshape.
    return out_cp.reshape(n, cout, h, w)
    # TODO(synk): PyTorch BatchNorm2d in training mode also updates
    # running_mean/running_var (unbiased); that internal state is not produced here.


def reference(x_nchw, scale_nc11, weight_oi, gamma, beta):
    """Pure-JAX reference in the original PyTorch weight layout (Cout, Cin)."""
    x = x_nchw * scale_nc11
    y = jnp.einsum("nchw,oc->nohw", x, weight_oi)
    mean = jnp.mean(y, axis=(0, 2, 3), keepdims=True)
    var = jnp.mean((y - mean) ** 2, axis=(0, 2, 3), keepdims=True)
    y_hat = (y - mean) / jnp.sqrt(var + EPS)
    return y_hat * gamma.reshape(1, -1, 1, 1) + beta.reshape(1, -1, 1, 1)


if __name__ == "__main__":
    N, CIN, H, W = 1, 960, 14, 14
    COUT = 160

    key = jax.random.PRNGKey(0)
    k1, k2, k3 = jax.random.split(key, 3)

    x312 = jax.random.normal(k1, (N, CIN, H, W), dtype=jnp.float32)
    x317 = jax.random.normal(k2, (N, CIN, 1, 1), dtype=jnp.float32)

    # Conv2d(960, 160, 1x1, bias=False) weight in PyTorch layout (Cout, Cin).
    conv_w_oi = (jax.random.normal(k3, (COUT, CIN), dtype=jnp.float32)
                 * (1.0 / jnp.sqrt(CIN)))
    # One-time layout prep (would happen at checkpoint-load time, not per step).
    conv_w_io = jnp.transpose(conv_w_oi)                    # (Cin, Cout)
    # BatchNorm2d default affine init: weight=1, bias=0.
    bn_gamma = jnp.ones((COUT,), dtype=jnp.float32)
    bn_beta = jnp.zeros((COUT,), dtype=jnp.float32)

    out = fused_mul_conv1x1_bn(x312, x317, conv_w_io, bn_gamma, bn_beta)
    out = jax.block_until_ready(out)

    ref = reference(x312, x317, conv_w_oi, bn_gamma, bn_beta)
    assert out.shape == (N, COUT, H, W), out.shape
    assert jnp.allclose(out, ref, atol=1e-3, rtol=1e-3), float(
        jnp.max(jnp.abs(out - ref)))

    print("KERNEL_OK")
</pallas_src>

<mosaic_0001>
module attributes {stable_mosaic.version = 11 : i64} {
  func.func @_fused_kernel(%arg0: i32, %arg1: memref<320x196xf32, #tpu.memory_space<vmem>>, %arg2: memref<320x1xf32, #tpu.memory_space<vmem>>, %arg3: memref<320x160xf32, #tpu.memory_space<vmem>>, %arg4: memref<160x1xf32, #tpu.memory_space<vmem>>, %arg5: memref<160x1xf32, #tpu.memory_space<vmem>>, %arg6: memref<160x196xf32, #tpu.memory_space<vmem>>, %arg7: memref<160x196xf32, #tpu.memory_space<vmem>>) attributes {dimension_semantics = [#tpu.dimension_semantics<arbitrary>], iteration_bounds = array<i64: 3>, scalar_prefetch = 0 : i64, scratch_operands = 1 : i64, tpu.core_type = #tpu.core_type<tc>, window_params = [{transform_indices = @transform_0, window_bounds = array<i64: 320, 196>}, {transform_indices = @transform_1, window_bounds = array<i64: 320, 1>}, {transform_indices = @transform_2, window_bounds = array<i64: 320, 160>}, {pipeline_mode = #tpu.pipeline_mode<synchronous>, transform_indices = @transform_3, window_bounds = array<i64: 160, 1>}, {pipeline_mode = #tpu.pipeline_mode<synchronous>, transform_indices = @transform_4, window_bounds = array<i64: 160, 1>}, {pipeline_mode = #tpu.pipeline_mode<synchronous>, transform_indices = @transform_5, window_bounds = array<i64: 160, 196>}]} {
    %c0_i32 = arith.constant 0 : i32
    %0 = arith.cmpi eq, %arg0, %c0_i32 : i32
    %1 = arith.extui %0 : i1 to i32
    %c0_i32_0 = arith.constant 0 : i32
    %2 = arith.cmpi ne, %1, %c0_i32_0 : i32
    scf.if %2 {
      %cst_11 = arith.constant 0.000000e+00 : f32
      %15 = vector.broadcast %cst_11 : f32 to vector<160x196xf32>
      %c0_12 = arith.constant 0 : index
      %c0_13 = arith.constant 0 : index
      %16 = vector.load %arg7[%c0_12, %c0_13] : memref<160x196xf32, #tpu.memory_space<vmem>>, vector<160x196xf32>
      tpu.vector_store %arg7[%c0_12, %c0_13], %15 {strides = array<i32>} : memref<160x196xf32, #tpu.memory_space<vmem>>, vector<160x196xf32>,
    } else {
    }
    %c0 = arith.constant 0 : index
    %c0_1 = arith.constant 0 : index
    %3 = vector.load %arg3[%c0, %c0_1] : memref<320x160xf32, #tpu.memory_space<vmem>>, vector<320x160xf32>
    %c0_2 = arith.constant 0 : index
    %c0_3 = arith.constant 0 : index
    %4 = vector.load %arg2[%c0_2, %c0_3] : memref<320x1xf32, #tpu.memory_space<vmem>>, vector<320x1xf32>
    %5 = vector.broadcast %4 : vector<320x1xf32> to vector<320x160xf32>
    %6 = arith.mulf %3, %5 : vector<320x160xf32>
    %c0_4 = arith.constant 0 : index
    %c0_5 = arith.constant 0 : index
    %7 = vector.load %arg7[%c0_4, %c0_5] : memref<160x196xf32, #tpu.memory_space<vmem>>, vector<160x196xf32>
    %c0_6 = arith.constant 0 : index
    %c0_7 = arith.constant 0 : index
    %8 = vector.load %arg1[%c0_6, %c0_7] : memref<320x196xf32, #tpu.memory_space<vmem>>, vector<320x196xf32>
    %cst = arith.constant dense<0.000000e+00> : vector<160x196xf32>
    %9 = tpu.matmul %6, %8, %cst {dimension_numbers = #tpu.dot_dimension_numbers<[0], [0], [1], [1], [0, 1, 1, 1], [], []>} : vector<320x160xf32>, vector<320x196xf32>, vector<160x196xf32> -> vector<160x196xf32>
    %10 = arith.addf %7, %9 : vector<160x196xf32>
    %c0_8 = arith.constant 0 : index
    %c0_9 = arith.constant 0 : index
    %11 = vector.load %arg7[%c0_8, %c0_9] : memref<160x196xf32, #tpu.memory_space<vmem>>, vector<160x196xf32>
    tpu.vector_store %arg7[%c0_8, %c0_9], %10 {strides = array<i32>} : memref<160x196xf32, #tpu.memory_space<vmem>>, vector<160x196xf32>,
    %c2_i32 = arith.constant 2 : i32
    %12 = arith.cmpi eq, %arg0, %c2_i32 : i32
    %13 = arith.extui %12 : i1 to i32
    %c0_i32_10 = arith.constant 0 : i32
    %14 = arith.cmpi ne, %13, %c0_i32_10 : i32
    scf.if %14 {
      %c0_11 = arith.constant 0 : index
      %c0_12 = arith.constant 0 : index
      %15 = vector.load %arg7[%c0_11, %c0_12] : memref<160x196xf32, #tpu.memory_space<vmem>>, vector<160x196xf32>
      %cst_13 = arith.constant dense<0.000000e+00> : vector<160xf32>
      %16 = vector.multi_reduction <add>, %15, %cst_13 [1] : vector<160x196xf32> to vector<160xf32>
      %17 = vector.shape_cast %16 : vector<160xf32> to vector<160x1xf32>
      %18 = arith.mulf %15, %15 : vector<160x196xf32>
      %cst_14 = arith.constant dense<0.000000e+00> : vector<160xf32>
      %19 = vector.multi_reduction <add>, %18, %cst_14 [1] : vector<160x196xf32> to vector<160xf32>
      %20 = vector.shape_cast %19 : vector<160xf32> to vector<160x1xf32>
      %cst_15 = arith.constant 0.00510204071 : f32
      %21 = vector.broadcast %cst_15 : f32 to vector<160x1xf32>
      %22 = arith.mulf %17, %21 : vector<160x1xf32>
      %cst_16 = arith.constant 0.00510204071 : f32
      %23 = vector.broadcast %cst_16 : f32 to vector<160x1xf32>
      %24 = arith.mulf %20, %23 : vector<160x1xf32>
      %25 = arith.mulf %22, %22 : vector<160x1xf32>
      %26 = arith.subf %24, %25 : vector<160x1xf32>
      %cst_17 = arith.constant 0.000000e+00 : f32
      %27 = vector.broadcast %cst_17 : f32 to vector<160x1xf32>
      %28 = arith.maximumf %26, %27 : vector<160x1xf32>
      %c0_18 = arith.constant 0 : index
      %c0_19 = arith.constant 0 : index
      %29 = vector.load %arg4[%c0_18, %c0_19] : memref<160x1xf32, #tpu.memory_space<vmem>>, vector<160x1xf32>
      %cst_20 = arith.constant 9.99999974E-6 : f32
      %30 = vector.broadcast %cst_20 : f32 to vector<160x1xf32>
      %31 = arith.addf %28, %30 : vector<160x1xf32>
      %32 = math.rsqrt %31 : vector<160x1xf32>
      %33 = arith.mulf %29, %32 : vector<160x1xf32>
      %c0_21 = arith.constant 0 : index
      %c0_22 = arith.constant 0 : index
      %34 = vector.load %arg5[%c0_21, %c0_22] : memref<160x1xf32, #tpu.memory_space<vmem>>, vector<160x1xf32>
      %35 = arith.mulf %22, %33 : vector<160x1xf32>
      %36 = arith.subf %34, %35 : vector<160x1xf32>
      %37 = vector.broadcast %33 : vector<160x1xf32> to vector<160x196xf32>
      %38 = arith.mulf %15, %37 : vector<160x196xf32>
      %39 = vector.broadcast %36 : vector<160x1xf32> to vector<160x196xf32>
      %40 = arith.addf %38, %39 : vector<160x196xf32>
      %c0_23 = arith.constant 0 : index
      %c0_24 = arith.constant 0 : index
      %41 = vector.load %arg6[%c0_23, %c0_24] : memref<160x196xf32, #tpu.memory_space<vmem>>, vector<160x196xf32>
      tpu.vector_store %arg6[%c0_23, %c0_24], %40 {strides = array<i32>} : memref<160x196xf32, #tpu.memory_space<vmem>>, vector<160x196xf32>,
    } else {
    }
    return
  }
  func.func @transform_0(%arg0: i32) -> (i32, i32) {
    %c0_i32 = arith.constant 0 : i32
    %c0_i32_0 = arith.constant 0 : i32
    return %arg0, %c0_i32 : i32, i32
  }
  func.func @transform_1(%arg0: i32) -> (i32, i32) {
    %c0_i32 = arith.constant 0 : i32
    %c0_i32_0 = arith.constant 0 : i32
    return %arg0, %c0_i32 : i32, i32
  }
  func.func @transform_2(%arg0: i32) -> (i32, i32) {
    %c0_i32 = arith.constant 0 : i32
    %c0_i32_0 = arith.constant 0 : i32
    return %arg0, %c0_i32 : i32, i32
  }
  func.func @transform_3(%arg0: i32) -> (i32, i32) {
    %c0_i32 = arith.constant 0 : i32
    %c0_i32_0 = arith.constant 0 : i32
    %c0_i32_1 = arith.constant 0 : i32
    return %c0_i32, %c0_i32_0 : i32, i32
  }
  func.func @transform_4(%arg0: i32) -> (i32, i32) {
    %c0_i32 = arith.constant 0 : i32
    %c0_i32_0 = arith.constant 0 : i32
    %c0_i32_1 = arith.constant 0 : i32
    return %c0_i32, %c0_i32_0 : i32, i32
  }
  func.func @transform_5(%arg0: i32) -> (i32, i32) {
    %c0_i32 = arith.constant 0 : i32
    %c0_i32_0 = arith.constant 0 : i32
    %c0_i32_1 = arith.constant 0 : i32
    return %c0_i32, %c0_i32_0 : i32, i32
  }
}

</mosaic_0001>

<llo_original>
// kernel: tpu_custom_call.1
$region0: #{tpu_custom_call.1}
  #allocation0 [shape = 'u32[]', space=smem, size = 0x4, offset = 0x4, fixed_abs, tag = 'smem constant byte address 0x4 - core index']
  #allocation1 [shape = 'u32[144,128]{1,0:T(1,128)}', space=vmem, size = 0x12000, scoped, tag = 'internal scratch']
  #allocation2 [shape = 'f32[160,196]{1,0:T(8,128)}', space=vmem, size = 0x28000, scoped, tag = 'scratch operand']
  %s0 = inlined_call_operand.vmem [shape: f32[960,196], index: 0, kind: input, shape index: {}]
  %s1 = inlined_call_operand.vmem [shape: f32[960,1], index: 1, kind: input, shape index: {}]
  %s2 = inlined_call_operand.vmem [shape: f32[960,160], index: 2, kind: input, shape index: {}]
  %s3 = inlined_call_operand.vmem [shape: f32[160,1], index: 3, kind: input, shape index: {}]
  %s4 = inlined_call_operand.vmem [shape: f32[160,1], index: 4, kind: input, shape index: {}]
  %s5 = inlined_call_operand.hbm [shape: f32[160,196], index: 5, kind: output, shape index: {}]
  %s6 = sld [smem:[#allocation0]]
  $region61: #{tpu_custom_call.1} parent=0
    _
  %s8 = ssub.s32 1, %s6
  %s9 = scalar_select 0, %s8, %s6
  $region1: #{tpu_custom_call.1} parent=0
    #allocation3 [shape = 'u8[163840]{0}', space=vmem, size = 0x28000, scoped, tag = 'output window, operand 0, single buffered']
    #allocation4 [shape = 's32[2]{0}', space=sflag, size = 0x8, scoped, tag = 'scoped memory for tpu_custom_call.1']
    %10 = vsyncpa [#allocation4], 0
    loop: start=0, step=1, limit=5
    $region2: #{tpu_custom_call.1} parent=1 // loop_pre_header
      _
    $region3: #{tpu_custom_call.1} parent=1 // loop_header
      %s12 = sphi 0, %s16
      %p13 = scmp.ge.s32.totalorder %s12, 5
      %s22 = sphi 0, %s24
      %s25 = sphi 0, %s22
      %s26 = sphi 0, %s25
      %s42 = sphi 0, %s26
      %s48 = sphi 0, %s50
      %s51 = sphi 0, %s48
      %s52 = sphi 0, %s51
      %s68 = sphi 0, %s52
      %s74 = sphi 0, %s76
      %s77 = sphi 0, %s74
      %s78 = sphi 0, %s77
      %s94 = sphi 0, %s78
      %s98 = sphi 0, %s98
      %s100 = sphi 0, %s98
      %s101 = sphi 0, %s100
      %s115 = sphi 0, %s101
      %s119 = sphi 0, %s119
      %s121 = sphi 0, %s119
      %s122 = sphi 0, %s121
      %s136 = sphi 0, %s122
      %s140 = sphi 0, %s140
      %s142 = sphi 0, %s140
      %s143 = sphi 0, %s142
      %s157 = sphi 0, %s143
    $region4: #{tpu_custom_call.1} parent=1 // loop_header_branch
      %15 = sbr.rel (%p13) target = $region8
    $region5: #{tpu_custom_call.1} parent=1 // loop_body
      %s17 = ssub.s32 %s12, 1
      %s18 = ssub.s32 %s12, 2
      %s19 = sadd.s32 %s12, 1
      %s20 = ssub.s32 %s12, %s19
      %p21 = scmp.eq.s32.totalorder %s20, 0
      %s23 = sadd.s32 %s22, 1
      %s24 = scalar_select %p21, %s22, %s23
      %p27 = pneg %p21
      %p28 = scmp.eq.s32.totalorder %s12, 2
      %p29 = por %p27, %p28
      %p30 = scmp.ne.s32.totalorder %s22, %s25
      %p31 = scmp.eq.s32.totalorder %s12, 0
      %p32 = por %p30, %p31
      %p33 = scmp.ne.s32.totalorder %s22, %s25
      %p34 = scmp.eq.s32.totalorder %s17, 2
      %p35 = por %p33, %p34
      %p36 = scmp.ne.s32.totalorder %s25, %s26
      %p37 = scmp.eq.s32.totalorder %s17, 0
      %p38 = por %p36, %p37
      %p39 = scmp.ne.s32.totalorder %s25, %s26
      %p40 = scmp.eq.s32.totalorder %s18, 2
      %p41 = por %p39, %p40
      %p43 = scmp.ne.s32.totalorder %s26, %s42
      %p44 = scmp.eq.s32.totalorder %s18, 0
      %p45 = por %p43, %p44
      %s46 = ssub.s32 %s12, %s19
      %p47 = scmp.eq.s32.totalorder %s46, 0
      %s49 = sadd.s32 %s48, 1
      %s50 = scalar_select %p47, %s48, %s49
      %p53 = pneg %p47
      %p54 = scmp.eq.s32.totalorder %s12, 2
      %p55 = por %p53, %p54
      %p56 = scmp.ne.s32.totalorder %s48, %s51
      %p57 = scmp.eq.s32.totalorder %s12, 0
      %p58 = por %p56, %p57
      %p59 = scmp.ne.s32.totalorder %s48, %s51
      %p60 = scmp.eq.s32.totalorder %s17, 2
      %p61 = por %p59, %p60
      %p62 = scmp.ne.s32.totalorder %s51, %s52
      %p63 = scmp.eq.s32.totalorder %s17, 0
      %p64 = por %p62, %p63
      %p65 = scmp.ne.s32.totalorder %s51, %s52
      %p66 = scmp.eq.s32.totalorder %s18, 2
      %p67 = por %p65, %p66
      %p69 = scmp.ne.s32.totalorder %s52, %s68
      %p70 = scmp.eq.s32.totalorder %s18, 0
      %p71 = por %p69, %p70
      %s72 = ssub.s32 %s12, %s19
      %p73 = scmp.eq.s32.totalorder %s72, 0
      %s75 = sadd.s32 %s74, 1
      %s76 = scalar_select %p73, %s74, %s75
      %p79 = pneg %p73
      %p80 = scmp.eq.s32.totalorder %s12, 2
      %p81 = por %p79, %p80
      %p82 = scmp.ne.s32.totalorder %s74, %s77
      %p83 = scmp.eq.s32.totalorder %s12, 0
      %p84 = por %p82, %p83
      %p85 = scmp.ne.s32.totalorder %s74, %s77
      %p86 = scmp.eq.s32.totalorder %s17, 2
      %p87 = por %p85, %p86
      %p88 = scmp.ne.s32.totalorder %s77, %s78
      %p89 = scmp.eq.s32.totalorder %s17, 0
      %p90 = por %p88, %p89
      %p91 = scmp.ne.s32.totalorder %s77, %s78
      %p92 = scmp.eq.s32.totalorder %s18, 2
      %p93 = por %p91, %p92
      %p95 = scmp.ne.s32.totalorder %s78, %s94
      %p96 = scmp.eq.s32.totalorder %s18, 0
      %p97 = por %p95, %p96
      %s99 = sadd.s32 %s98, 1
      %p102 = scmp.eq.s32.totalorder %s12, 2
      %p103 = scmp.ne.s32.totalorder %s98, %s100
      %p104 = scmp.eq.s32.totalorder %s12, 0
      %p105 = por %p103, %p104
      %p106 = scmp.ne.s32.totalorder %s98, %s100
      %p107 = scmp.eq.s32.totalorder %s17, 2
      %p108 = por %p106, %p107
      %p109 = scmp.ne.s32.totalorder %s100, %s101
      %p110 = scmp.eq.s32.totalorder %s17, 0
      %p111 = por %p109, %p110
      %p112 = scmp.ne.s32.totalorder %s100, %s101
      %p113 = scmp.eq.s32.totalorder %s18, 2
      %p114 = por %p112, %p113
      %p116 = scmp.ne.s32.totalorder %s101, %s115
      %p117 = scmp.eq.s32.totalorder %s18, 0
      %p118 = por %p116, %p117
      %s120 = sadd.s32 %s119, 1
      %p123 = scmp.eq.s32.totalorder %s12, 2
      %p124 = scmp.ne.s32.totalorder %s119, %s121
      %p125 = scmp.eq.s32.totalorder %s12, 0
      %p126 = por %p124, %p125
      %p127 = scmp.ne.s32.totalorder %s119, %s121
      %p128 = scmp.eq.s32.totalorder %s17, 2
      %p129 = por %p127, %p128
      %p130 = scmp.ne.s32.totalorder %s121, %s122
      %p131 = scmp.eq.s32.totalorder %s17, 0
      %p132 = por %p130, %p131
      %p133 = scmp.ne.s32.totalorder %s121, %s122
      %p134 = scmp.eq.s32.totalorder %s18, 2
      %p135 = por %p133, %p134
      %p137 = scmp.ne.s32.totalorder %s122, %s136
      %p138 = scmp.eq.s32.totalorder %s18, 0
      %p139 = por %p137, %p138
      %s141 = sadd.s32 %s140, 1
      %p144 = scmp.eq.s32.totalorder %s12, 2
      %p145 = scmp.ne.s32.totalorder %s140, %s142
      %p146 = scmp.eq.s32.totalorder %s12, 0
      %p147 = por %p145, %p146
      %p148 = scmp.ne.s32.totalorder %s140, %s142
      %p149 = scmp.eq.s32.totalorder %s17, 2
      %p150 = por %p148, %p149
      %p151 = scmp.ne.s32.totalorder %s142, %s143
      %p152 = scmp.eq.s32.totalorder %s17, 0
      %p153 = por %p151, %p152
      %p154 = scmp.ne.s32.totalorder %s142, %s143
      %p155 = scmp.eq.s32.totalorder %s18, 2
      %p156 = por %p154, %p155
      %p158 = scmp.ne.s32.totalorder %s143, %s157
      %p159 = scmp.eq.s32.totalorder %s18, 0
      %p160 = por %p158, %p159
      %p161 = scmp.le.s32.totalorder 1, %s12
      %p162 = scmp.lt.s32.totalorder %s12, 4
      %p163 = pnand %p161, %p162
      %p164 = pneg %p163
      // Predicated region
      $region9: #{tpu_custom_call.1} parent=5 // pred_check
        _
      $region10: #{tpu_custom_call.1} parent=5 // pred_check_branch
        %166 = sbr.rel (%p163) target = $region12
      $region11: #{tpu_custom_call.1} parent=5 // pred_region
        %s167 = ssub.s32 %s12, 1
        // Predicated region
        $region13: #{tpu_custom_call.1} parent=11 // pred_check
          %p168 = pneg %p111
        $region14: #{tpu_custom_call.1} parent=11 // pred_check_branch
          %170 = sbr.rel (%p168) target = $region16
        $region15: #{tpu_custom_call.1} parent=11 // pred_region
          _
        $region16: #{tpu_custom_call.1} parent=11 // pred_fallthru
          _
        // Predicated region
        $region17: #{tpu_custom_call.1} parent=11 // pred_check
          %p171 = pneg %p132
        $region18: #{tpu_custom_call.1} parent=11 // pred_check_branch
          %173 = sbr.rel (%p171) target = $region20
        $region19: #{tpu_custom_call.1} parent=11 // pred_region
          _
        $region20: #{tpu_custom_call.1} parent=11 // pred_fallthru
          _
      $region12: #{tpu_custom_call.1} parent=5 // pred_fallthru
        _
      %p174 = scmp.lt.s32.totalorder %s12, 3
      // Predicated region
      $region21: #{tpu_custom_call.1} parent=5 // pred_check
        %p175 = pneg %p174
      $region22: #{tpu_custom_call.1} parent=5 // pred_check_branch
        %177 = sbr.rel (%p175) target = $region24
      $region23: #{tpu_custom_call.1} parent=5 // pred_region
        // Predicated region
        $region25: #{tpu_custom_call.1} parent=23 // pred_check
          %p178 = pneg %p32
        $region26: #{tpu_custom_call.1} parent=23 // pred_check_branch
          %180 = sbr.rel (%p178) target = $region28
        $region27: #{tpu_custom_call.1} parent=23 // pred_region
          %s181 = smul.u32 40, %s12
          %p182 = scmp.lt.s32.totalorder %s181, 119
          %s183 = scalar_select %p182, %s181, 119
          %s184 = smul.addr %s183, 2
          %s185 = smul.addr %s184, 8
          %s186 = scalar_lea.vmem %s0, %s185
          %s187 = smul.u32 40, %s12
        $region28: #{tpu_custom_call.1} parent=23 // pred_fallthru
          _
        // Predicated region
        $region29: #{tpu_custom_call.1} parent=23 // pred_check
          %p188 = pneg %p58
        $region30: #{tpu_custom_call.1} parent=23 // pred_check_branch
          %190 = sbr.rel (%p188) target = $region32
        $region31: #{tpu_custom_call.1} parent=23 // pred_region
          %s191 = smul.u32 40, %s12
          %p192 = scmp.lt.s32.totalorder %s191, 119
          %s193 = scalar_select %p192, %s191, 119
          %s194 = smul.addr %s193, 8
          %s195 = scalar_lea.vmem %s1, %s194
          %s196 = smul.u32 40, %s12
        $region32: #{tpu_custom_call.1} parent=23 // pred_fallthru
          _
        // Predicated region
        $region33: #{tpu_custom_call.1} parent=23 // pred_check
          %p197 = pneg %p84
        $region34: #{tpu_custom_call.1} parent=23 // pred_check_branch
          %199 = sbr.rel (%p197) target = $region36
        $region35: #{tpu_custom_call.1} parent=23 // pred_region
          %s200 = smul.u32 40, %s12
          %p201 = scmp.lt.s32.totalorder %s200, 119
          %s202 = scalar_select %p201, %s200, 119
          %s203 = smul.addr %s202, 2
          %s204 = smul.addr %s203, 8
          %s205 = scalar_lea.vmem %s2, %s204
          %s206 = smul.u32 40, %s12
        $region36: #{tpu_custom_call.1} parent=23 // pred_fallthru
          _
      $region24: #{tpu_custom_call.1} parent=5 // pred_fallthru
        _
      %p207 = scmp.le.s32.totalorder 1, %s12
      %p208 = scmp.lt.s32.totalorder %s12, 4
      %p209 = pnand %p207, %p208
      %p210 = pneg %p209
      // Predicated region
      $region37: #{tpu_custom_call.1} parent=5 // pred_check
        _
      $region38: #{tpu_custom_call.1} parent=5 // pred_check_branch
        %212 = sbr.rel (%p209) target = $region40
      $region39: #{tpu_custom_call.1} parent=5 // pred_region
        %s213 = ssub.s32 %s12, 1
        %s214 = smul.u32 40, %s17
        %p215 = scmp.lt.s32.totalorder %s214, 119
        %s216 = scalar_select %p215, %s214, 119
        %s217 = smul.addr %s216, 2
        %s218 = smul.addr %s217, 8
        %s219 = scalar_lea.vmem %s0, %s218
        %p220 = pneg %p38
        %p221 = pneg %p35
        %s222 = smul.u32 40, %s17
        %p223 = scmp.lt.s32.totalorder %s222, 119
        %s224 = scalar_select %p223, %s222, 119
        %s225 = smul.addr %s224, 8
        %s226 = scalar_lea.vmem %s1, %s225
        %p227 = pneg %p64
        %p228 = pneg %p61
        %s229 = smul.u32 40, %s17
        %p230 = scmp.lt.s32.totalorder %s229, 119
        %s231 = scalar_select %p230, %s229, 119
        %s232 = smul.addr %s231, 2
        %s233 = smul.addr %s232, 8
        %s234 = scalar_lea.vmem %s2, %s233
        %p235 = pneg %p90
        %p236 = pneg %p87
        %p237 = pneg %p111
        %p238 = pneg %p108
        %p239 = pneg %p132
        %p240 = pneg %p129
        %p241 = pneg %p153
        %p242 = pneg %p150
        %s243 = smul.u32 40, %s17
        %p244 = scmp.lt.s32.totalorder %s243, 119
        %s245 = scalar_select %p244, %s243, 119
        %s246 = smul.addr %s245, 2
        %s247 = smul.addr %s246, 8
        %s248 = scalar_lea.vmem %s0, %s247
        %s249 = smul.u32 40, %s17
        %s250 = smul.u32 40, %s17
        %p251 = scmp.lt.s32.totalorder %s250, 119
        %s252 = scalar_select %p251, %s250, 119
        %s253 = smul.addr %s252, 8
        %s254 = scalar_lea.vmem %s1, %s253
        %s255 = smul.u32 40, %s17
        %s256 = smul.u32 40, %s17
        %p257 = scmp.lt.s32.totalorder %s256, 119
        %s258 = scalar_select %p257, %s256, 119
        %s259 = smul.addr %s258, 2
        %s260 = smul.addr %s259, 8
        %s261 = scalar_lea.vmem %s2, %s260
        %s262 = smul.u32 40, %s17
        %p263 = scmp.eq.s32.totalorder %s17, 0
        // Predicated region
        $region41: #{tpu_custom_call.1} parent=39 // pred_check
          %p264 = pneg %p263
        $region42: #{tpu_custom_call.1} parent=39 // pred_check_branch
          %266 = sbr.rel (%p264) target = $region44
        $region43: #{tpu_custom_call.1} parent=39 // pred_region
          %267 = vst [vmem:[#allocation2] sm:$0xff] 0.0
          %vm268 = vcmask 556032
          %269 = vst.msk [vmem:[#allocation2 + $0x8] sm:$0xff] %vm268, 0.0
          %270 = vst [vmem:[#allocation2 + $0x10] sm:$0xff] 0.0
          %271 = vst.msk [vmem:[#allocation2 + $0x18] sm:$0xff] %vm268, 0.0
          %272 = vst [vmem:[#allocation2 + $0x20] sm:$0xff] 0.0
          %273 = vst.msk [vmem:[#allocation2 + $0x28] sm:$0xff] %vm268, 0.0
          %274 = vst [vmem:[#allocation2 + $0x30] sm:$0xff] 0.0
          %275 = vst.msk [vmem:[#allocation2 + $0x38] sm:$0xff] %vm268, 0.0
          %276 = vst [vmem:[#allocation2 + $0x40] sm:$0xff] 0.0
          %277 = vst.msk [vmem:[#allocation2 + $0x48] sm:$0xff] %vm268, 0.0
          %278 = vst [vmem:[#allocation2 + $0x50] sm:$0xff] 0.0
          %279 = vst.msk [vmem:[#allocation2 + $0x58] sm:$0xff] %vm268, 0.0
          %280 = vst [vmem:[#allocation2 + $0x60] sm:$0xff] 0.0
          %281 = vst.msk [vmem:[#allocation2 + $0x68] sm:$0xff] %vm268, 0.0
          %282 = vst [vmem:[#allocation2 + $0x70] sm:$0xff] 0.0
          %283 = vst.msk [vmem:[#allocation2 + $0x78] sm:$0xff] %vm268, 0.0
          %284 = vst [vmem:[#allocation2 + $0x80] sm:$0xff] 0.0
          %285 = vst.msk [vmem:[#allocation2 + $0x88] sm:$0xff] %vm268, 0.0
          %286 = vst [vmem:[#allocation2 + $0x90] sm:$0xff] 0.0
          %287 = vst.msk [vmem:[#allocation2 + $0x98] sm:$0xff] %vm268, 0.0
          %288 = vst [vmem:[#allocation2 + $0xa0] sm:$0xff] 0.0
          %289 = vst.msk [vmem:[#allocation2 + $0xa8] sm:$0xff] %vm268, 0.0
          %290 = vst [vmem:[#allocation2 + $0xb0] sm:$0xff] 0.0
          %291 = vst.msk [vmem:[#allocation2 + $0xb8] sm:$0xff] %vm268, 0.0
          %292 = vst [vmem:[#allocation2 + $0xc0] sm:$0xff] 0.0
          %293 = vst.msk [vmem:[#allocation2 + $0xc8] sm:$0xff] %vm268, 0.0
          %294 = vst [vmem:[#allocation2 + $0xd0] sm:$0xff] 0.0
          %295 = vst.msk [vmem:[#allocation2 + $0xd8] sm:$0xff] %vm268, 0.0
          %296 = vst [vmem:[#allocation2 + $0xe0] sm:$0xff] 0.0
          %297 = vst.msk [vmem:[#allocation2 + $0xe8] sm:$0xff] %vm268, 0.0
          %298 = vst [vmem:[#allocation2 + $0xf0] sm:$0xff] 0.0
          %299 = vst.msk [vmem:[#allocation2 + $0xf8] sm:$0xff] %vm268, 0.0
          %300 = vst [vmem:[#allocation2 + $0x100] sm:$0xff] 0.0
          %301 = vst.msk [vmem:[#allocation2 + $0x108] sm:$0xff] %vm268, 0.0
          %302 = vst [vmem:[#allocation2 + $0x110] sm:$0xff] 0.0
          %303 = vst.msk [vmem:[#allocation2 + $0x118] sm:$0xff] %vm268, 0.0
          %304 = vst [vmem:[#allocation2 + $0x120] sm:$0xff] 0.0
          %305 = vst.msk [vmem:[#allocation2 + $0x128] sm:$0xff] %vm268, 0.0
          %306 = vst [vmem:[#allocation2 + $0x130] sm:$0xff] 0.0
          %307 = vst.msk [vmem:[#allocation2 + $0x138] sm:$0xff] %vm268, 0.0
        $region44: #{tpu_custom_call.1} parent=39 // pred_fallthru
          _
        %v308 = vld [vmem:[%s261] sm:$0xff]
        %v309 = vld [vmem:[%s261 + $0x8] sm:$0xff]
        %v310 = vld [vmem:[%s261 + $0x10] sm:$0xff]
        %v311 = vld [vmem:[%s261 + $0x18] sm:$0xff]
        %v312 = vld [vmem:[%s261 + $0x20] sm:$0xff]
        %v313 = vld [vmem:[%s261 + $0x28] sm:$0xff]
        %v314 = vld [vmem:[%s261 + $0x30] sm:$0xff]
        %v315 = vld [vmem:[%s261 + $0x38] sm:$0xff]
        %v316 = vld [vmem:[%s261 + $0x40] sm:$0xff]
        %v317 = vld [vmem:[%s261 + $0x48] sm:$0xff]
        %v318 = vld [vmem:[%s261 + $0x50] sm:$0xff]
        %v319 = vld [vmem:[%s261 + $0x58] sm:$0xff]
        %v320 = vld [vmem:[%s261 + $0x60] sm:$0xff]
        %v321 = vld [vmem:[%s261 + $0x68] sm:$0xff]
        %v322 = vld [vmem:[%s261 + $0x70] sm:$0xff]
        %v323 = vld [vmem:[%s261 + $0x78] sm:$0xff]
        %v324 = vld [vmem:[%s261 + $0x80] sm:$0xff]
        %v325 = vld [vmem:[%s261 + $0x88] sm:$0xff]
        %v326 = vld [vmem:[%s261 + $0x90] sm:$0xff]
        %v327 = vld [vmem:[%s261 + $0x98] sm:$0xff]
        %v328 = vld [vmem:[%s261 + $0xa0] sm:$0xff]
        %v329 = vld [vmem:[%s261 + $0xa8] sm:$0xff]
        %v330 = vld [vmem:[%s261 + $0xb0] sm:$0xff]
        %v331 = vld [vmem:[%s261 + $0xb8] sm:$0xff]
        %v332 = vld [vmem:[%s261 + $0xc0] sm:$0xff]
        %v333 = vld [vmem:[%s261 + $0xc8] sm:$0xff]
        %v334 = vld [vmem:[%s261 + $0xd0] sm:$0xff]
        %v335 = vld [vmem:[%s261 + $0xd8] sm:$0xff]
        %v336 = vld [vmem:[%s261 + $0xe0] sm:$0xff]
        %v337 = vld [vmem:[%s261 + $0xe8] sm:$0xff]
        %v338 = vld [vmem:[%s261 + $0xf0] sm:$0xff]
        %v339 = vld [vmem:[%s261 + $0xf8] sm:$0xff]
        %v340 = vld [vmem:[%s261 + $0x100] sm:$0xff]
        %v341 = vld [vmem:[%s261 + $0x108] sm:$0xff]
        %v342 = vld [vmem:[%s261 + $0x110] sm:$0xff]
        %v343 = vld [vmem:[%s261 + $0x118] sm:$0xff]
        %v344 = vld [vmem:[%s261 + $0x120] sm:$0xff]
        %v345 = vld [vmem:[%s261 + $0x128] sm:$0xff]
        %v346 = vld [vmem:[%s261 + $0x130] sm:$0xff]
        %v347 = vld [vmem:[%s261 + $0x138] sm:$0xff]
        %v348 = vld [vmem:[%s261 + $0x140] sm:$0xff]
        %v349 = vld [vmem:[%s261 + $0x148] sm:$0xff]
        %v350 = vld [vmem:[%s261 + $0x150] sm:$0xff]
        %v351 = vld [vmem:[%s261 + $0x158] sm:$0xff]
        %v352 = vld [vmem:[%s261 + $0x160] sm:$0xff]
        %v353 = vld [vmem:[%s261 + $0x168] sm:$0xff]
        %v354 = vld [vmem:[%s261 + $0x170] sm:$0xff]
        %v355 = vld [vmem:[%s261 + $0x178] sm:$0xff]
        %v356 = vld [vmem:[%s261 + $0x180] sm:$0xff]
        %v357 = vld [vmem:[%s261 + $0x188] sm:$0xff]
        %v358 = vld [vmem:[%s261 + $0x190] sm:$0xff]
        %v359 = vld [vmem:[%s261 + $0x198] sm:$0xff]
        %v360 = vld [vmem:[%s261 + $0x1a0] sm:$0xff]
        %v361 = vld [vmem:[%s261 + $0x1a8] sm:$0xff]
        %v362 = vld [vmem:[%s261 + $0x1b0] sm:$0xff]
        %v363 = vld [vmem:[%s261 + $0x1b8] sm:$0xff]
        %v364 = vld [vmem:[%s261 + $0x1c0] sm:$0xff]
        %v365 = vld [vmem:[%s261 + $0x1c8] sm:$0xff]
        %v366 = vld [vmem:[%s261 + $0x1d0] sm:$0xff]
        %v367 = vld [vmem:[%s261 + $0x1d8] sm:$0xff]
        %v368 = vld [vmem:[%s261 + $0x1e0] sm:$0xff]
        %v369 = vld [vmem:[%s261 + $0x1e8] sm:$0xff]
        %v370 = vld [vmem:[%s261 + $0x1f0] sm:$0xff]
        %v371 = vld [vmem:[%s261 + $0x1f8] sm:$0xff]
        %v372 = vld [vmem:[%s261 + $0x200] sm:$0xff]
        %v373 = vld [vmem:[%s261 + $0x208] sm:$0xff]
        %v374 = vld [vmem:[%s261 + $0x210] sm:$0xff]
        %v375 = vld [vmem:[%s261 + $0x218] sm:$0xff]
        %v376 = vld [vmem:[%s261 + $0x220] sm:$0xff]
        %v377 = vld [vmem:[%s261 + $0x228] sm:$0xff]
        %v378 = vld [vmem:[%s261 + $0x230] sm:$0xff]
        %v379 = vld [vmem:[%s261 + $0x238] sm:$0xff]
        %v380 = vld [vmem:[%s261 + $0x240] sm:$0xff]
        %v381 = vld [vmem:[%s261 + $0x248] sm:$0xff]
        %v382 = vld [vmem:[%s261 + $0x250] sm:$0xff]
        %v383 = vld [vmem:[%s261 + $0x258] sm:$0xff]
        %v384 = vld [vmem:[%s261 + $0x260] sm:$0xff]
        %v385 = vld [vmem:[%s261 + $0x268] sm:$0xff]
        %v386 = vld [vmem:[%s261 + $0x270] sm:$0xff]
        %v387 = vld [vmem:[%s261 + $0x278] sm:$0xff]
        %v388 = vld [vmem:[%s254] sm:$0xff]
        %v389 = vld [vmem:[%s254 + $0x8] sm:$0xff]
        %v390 = vld [vmem:[%s254 + $0x10] sm:$0xff]
        %v391 = vld [vmem:[%s254 + $0x18] sm:$0xff]
        %v392 = vld [vmem:[%s254 + $0x20] sm:$0xff]
        %v393 = vld [vmem:[%s254 + $0x28] sm:$0xff]
        %v394 = vld [vmem:[%s254 + $0x30] sm:$0xff]
        %v395 = vld [vmem:[%s254 + $0x38] sm:$0xff]
        %v396 = vld [vmem:[%s254 + $0x40] sm:$0xff]
        %v397 = vld [vmem:[%s254 + $0x48] sm:$0xff]
        %v398 = vld [vmem:[%s254 + $0x50] sm:$0xff]
        %v399 = vld [vmem:[%s254 + $0x58] sm:$0xff]
        %v400 = vld [vmem:[%s254 + $0x60] sm:$0xff]
        %v401 = vld [vmem:[%s254 + $0x68] sm:$0xff]
        %v402 = vld [vmem:[%s254 + $0x70] sm:$0xff]
        %v403 = vld [vmem:[%s254 + $0x78] sm:$0xff]
        %v404 = vld [vmem:[%s254 + $0x80] sm:$0xff]
        %v405 = vld [vmem:[%s254 + $0x88] sm:$0xff]
        %v406 = vld [vmem:[%s254 + $0x90] sm:$0xff]
        %v407 = vld [vmem:[%s254 + $0x98] sm:$0xff]
        %v408 = vld [vmem:[%s254 + $0xa0] sm:$0xff]
        %v409 = vld [vmem:[%s254 + $0xa8] sm:$0xff]
        %v410 = vld [vmem:[%s254 + $0xb0] sm:$0xff]
        %v411 = vld [vmem:[%s254 + $0xb8] sm:$0xff]
        %v412 = vld [vmem:[%s254 + $0xc0] sm:$0xff]
        %v413 = vld [vmem:[%s254 + $0xc8] sm:$0xff]
        %v414 = vld [vmem:[%s254 + $0xd0] sm:$0xff]
        %v415 = vld [vmem:[%s254 + $0xd8] sm:$0xff]
        %v416 = vld [vmem:[%s254 + $0xe0] sm:$0xff]
        %v417 = vld [vmem:[%s254 + $0xe8] sm:$0xff]
        %v418 = vld [vmem:[%s254 + $0xf0] sm:$0xff]
        %v419 = vld [vmem:[%s254 + $0xf8] sm:$0xff]
        %v420 = vld [vmem:[%s254 + $0x100] sm:$0xff]
        %v421 = vld [vmem:[%s254 + $0x108] sm:$0xff]
        %v422 = vld [vmem:[%s254 + $0x110] sm:$0xff]
        %v423 = vld [vmem:[%s254 + $0x118] sm:$0xff]
        %v424 = vld [vmem:[%s254 + $0x120] sm:$0xff]
        %v425 = vld [vmem:[%s254 + $0x128] sm:$0xff]
        %v426 = vld [vmem:[%s254 + $0x130] sm:$0xff]
        %v427 = vld [vmem:[%s254 + $0x138] sm:$0xff]
        %429 = vset.pattern.permute.xlu0 0
        %430 = vperm.xlu0 %429, %v388
        %v431 = vpop.permute.xlu0 %430
        %434 = vset.pattern.permute.xlu0 0
        %435 = vperm.xlu0 %434, %v389
        %v436 = vpop.permute.xlu0 %435
        %439 = vset.pattern.permute.xlu0 0
        %440 = vperm.xlu0 %439, %v390
        %v441 = vpop.permute.xlu0 %440
        %444 = vset.pattern.permute.xlu0 0
        %445 = vperm.xlu0 %444, %v391
        %v446 = vpop.permute.xlu0 %445
        %449 = vset.pattern.permute.xlu0 0
        %450 = vperm.xlu0 %449, %v392
        %v451 = vpop.permute.xlu0 %450
        %454 = vset.pattern.permute.xlu0 0
        %455 = vperm.xlu0 %454, %v393
        %v456 = vpop.permute.xlu0 %455
        %459 = vset.pattern.permute.xlu0 0
        %460 = vperm.xlu0 %459, %v394
        %v461 = vpop.permute.xlu0 %460
        %464 = vset.pattern.permute.xlu0 0
        %465 = vperm.xlu0 %464, %v395
        %v466 = vpop.permute.xlu0 %465
        %469 = vset.pattern.permute.xlu0 0
        %470 = vperm.xlu0 %469, %v396
        %v471 = vpop.permute.xlu0 %470
        %474 = vset.pattern.permute.xlu0 0
        %475 = vperm.xlu0 %474, %v397
        %v476 = vpop.permute.xlu0 %475
        %479 = vset.pattern.permute.xlu0 0
        %480 = vperm.xlu0 %479, %v398
        %v481 = vpop.permute.xlu0 %480
        %484 = vset.pattern.permute.xlu0 0
        %485 = vperm.xlu0 %484, %v399
        %v486 = vpop.permute.xlu0 %485
        %489 = vset.pattern.permute.xlu0 0
        %490 = vperm.xlu0 %489, %v400
        %v491 = vpop.permute.xlu0 %490
        %494 = vset.pattern.permute.xlu0 0
        %495 = vperm.xlu0 %494, %v401
        %v496 = vpop.permute.xlu0 %495
        %499 = vset.pattern.permute.xlu0 0
        %500 = vperm.xlu0 %499, %v402
        %v501 = vpop.permute.xlu0 %500
        %504 = vset.pattern.permute.xlu0 0
        %505 = vperm.xlu0 %504, %v403
        %v506 = vpop.permute.xlu0 %505
        %509 = vset.pattern.permute.xlu0 0
        %510 = vperm.xlu0 %509, %v404
        %v511 = vpop.permute.xlu0 %510
        %514 = vset.pattern.permute.xlu0 0
        %515 = vperm.xlu0 %514, %v405
        %v516 = vpop.permute.xlu0 %515
        %519 = vset.pattern.permute.xlu0 0
        %520 = vperm.xlu0 %519, %v406
        %v521 = vpop.permute.xlu0 %520
        %524 = vset.pattern.permute.xlu0 0
        %525 = vperm.xlu0 %524, %v407
        %v526 = vpop.permute.xlu0 %525
        %529 = vset.pattern.permute.xlu0 0
        %530 = vperm.xlu0 %529, %v408
        %v531 = vpop.permute.xlu0 %530
        %534 = vset.pattern.permute.xlu0 0
        %535 = vperm.xlu0 %534, %v409
        %v536 = vpop.permute.xlu0 %535
        %539 = vset.pattern.permute.xlu0 0
        %540 = vperm.xlu0 %539, %v410
        %v541 = vpop.permute.xlu0 %540
        %544 = vset.pattern.permute.xlu0 0
        %545 = vperm.xlu0 %544, %v411
        %v546 = vpop.permute.xlu0 %545
        %549 = vset.pattern.permute.xlu0 0
        %550 = vperm.xlu0 %549, %v412
        %v551 = vpop.permute.xlu0 %550
        %554 = vset.pattern.permute.xlu0 0
        %555 = vperm.xlu0 %554, %v413
        %v556 = vpop.permute.xlu0 %555
        %559 = vset.pattern.permute.xlu0 0
        %560 = vperm.xlu0 %559, %v414
        %v561 = vpop.permute.xlu0 %560
        %564 = vset.pattern.permute.xlu0 0
        %565 = vperm.xlu0 %564, %v415
        %v566 = vpop.permute.xlu0 %565
        %569 = vset.pattern.permute.xlu0 0
        %570 = vperm.xlu0 %569, %v416
        %v571 = vpop.permute.xlu0 %570
        %574 = vset.pattern.permute.xlu0 0
        %575 = vperm.xlu0 %574, %v417
        %v576 = vpop.permute.xlu0 %575
        %579 = vset.pattern.permute.xlu0 0
        %580 = vperm.xlu0 %579, %v418
        %v581 = vpop.permute.xlu0 %580
        %584 = vset.pattern.permute.xlu0 0
        %585 = vperm.xlu0 %584, %v419
        %v586 = vpop.permute.xlu0 %585
        %589 = vset.pattern.permute.xlu0 0
        %590 = vperm.xlu0 %589, %v420
        %v591 = vpop.permute.xlu0 %590
        %594 = vset.pattern.permute.xlu0 0
        %595 = vperm.xlu0 %594, %v421
        %v596 = vpop.permute.xlu0 %595
        %599 = vset.pattern.permute.xlu0 0
        %600 = vperm.xlu0 %599, %v422
        %v601 = vpop.permute.xlu0 %600
        %604 = vset.pattern.permute.xlu0 0
        %605 = vperm.xlu0 %604, %v423
        %v606 = vpop.permute.xlu0 %605
        %609 = vset.pattern.permute.xlu0 0
        %610 = vperm.xlu0 %609, %v424
        %v611 = vpop.permute.xlu0 %610
        %614 = vset.pattern.permute.xlu0 0
        %615 = vperm.xlu0 %614, %v425
        %v616 = vpop.permute.xlu0 %615
        %619 = vset.pattern.permute.xlu0 0
        %620 = vperm.xlu0 %619, %v426
        %v621 = vpop.permute.xlu0 %620
        %624 = vset.pattern.permute.xlu0 0
        %625 = vperm.xlu0 %624, %v427
        %v626 = vpop.permute.xlu0 %625
        %v628 = vmul.f32 %v308, %v431
        %v629 = vmul.f32 %v309, %v431
        %v630 = vmul.f32 %v310, %v436
        %v631 = vmul.f32 %v311, %v436
        %v632 = vmul.f32 %v312, %v441
        %v633 = vmul.f32 %v313, %v441
        %v634 = vmul.f32 %v314, %v446
        %v635 = vmul.f32 %v315, %v446
        %v636 = vmul.f32 %v316, %v451
        %v637 = vmul.f32 %v317, %v451
        %v638 = vmul.f32 %v318, %v456
        %v639 = vmul.f32 %v319, %v456
        %v640 = vmul.f32 %v320, %v461
        %v641 = vmul.f32 %v321, %v461
        %v642 = vmul.f32 %v322, %v466
        %v643 = vmul.f32 %v323, %v466
        %v644 = vmul.f32 %v324, %v471
        %v645 = vmul.f32 %v325, %v471
        %v646 = vmul.f32 %v326, %v476
        %v647 = vmul.f32 %v327, %v476
        %v648 = vmul.f32 %v328, %v481
        %v649 = vmul.f32 %v329, %v481
        %v650 = vmul.f32 %v330, %v486
        %v651 = vmul.f32 %v331, %v486
        %v652 = vmul.f32 %v332, %v491
        %v653 = vmul.f32 %v333, %v491
        %v654 = vmul.f32 %v334, %v496
        %v655 = vmul.f32 %v335, %v496
        %v656 = vmul.f32 %v336, %v501
        %v657 = vmul.f32 %v337, %v501
        %v658 = vmul.f32 %v338, %v506
        %v659 = vmul.f32 %v339, %v506
        %v660 = vmul.f32 %v340, %v511
        %v661 = vmul.f32 %v341, %v511
        %v662 = vmul.f32 %v342, %v516
        %v663 = vmul.f32 %v343, %v516
        %v664 = vmul.f32 %v344, %v521
        %v665 = vmul.f32 %v345, %v521
        %v666 = vmul.f32 %v346, %v526
        %v667 = vmul.f32 %v347, %v526
        %v668 = vmul.f32 %v348, %v531
        %v669 = vmul.f32 %v349, %v531
        %v670 = vmul.f32 %v350, %v536
        %v671 = vmul.f32 %v351, %v536
        %v672 = vmul.f32 %v352, %v541
        %v673 = vmul.f32 %v353, %v541
        %v674 = vmul.f32 %v354, %v546
        %v675 = vmul.f32 %v355, %v546
        %v676 = vmul.f32 %v356, %v551
        %v677 = vmul.f32 %v357, %v551
        %v678 = vmul.f32 %v358, %v556
        %v679 = vmul.f32 %v359, %v556
        %v680 = vmul.f32 %v360, %v561
        %v681 = vmul.f32 %v361, %v561
        %v682 = vmul.f32 %v362, %v566
        %v683 = vmul.f32 %v363, %v566
        %v684 = vmul.f32 %v364, %v571
        %v685 = vmul.f32 %v365, %v571
        %v686 = vmul.f32 %v366, %v576
        %v687 = vmul.f32 %v367, %v576
        %v688 = vmul.f32 %v368, %v581
        %v689 = vmul.f32 %v369, %v581
        %v690 = vmul.f32 %v370, %v586
        %v691 = vmul.f32 %v371, %v586
        %v692 = vmul.f32 %v372, %v591
        %v693 = vmul.f32 %v373, %v591
        %v694 = vmul.f32 %v374, %v596
        %v695 = vmul.f32 %v375, %v596
        %v696 = vmul.f32 %v376, %v601
        %v697 = vmul.f32 %v377, %v601
        %v698 = vmul.f32 %v378, %v606
        %v699 = vmul.f32 %v379, %v606
        %v700 = vmul.f32 %v380, %v611
        %v701 = vmul.f32 %v381, %v611
        %v702 = vmul.f32 %v382, %v616
        %v703 = vmul.f32 %v383, %v616
        %v704 = vmul.f32 %v384, %v621
        %v705 = vmul.f32 %v385, %v621
        %v706 = vmul.f32 %v386, %v626
        %v707 = vmul.f32 %v387, %v626
        %v708 = vld [vmem:[#allocation2] sm:$0xff]
        %v709 = vld [vmem:[#allocation2 + $0x8] sm:$0xff]
        %v710 = vld [vmem:[#allocation2 + $0x10] sm:$0xff]
        %v711 = vld [vmem:[#allocation2 + $0x18] sm:$0xff]
        %v712 = vld [vmem:[#allocation2 + $0x20] sm:$0xff]
        %v713 = vld [vmem:[#allocation2 + $0x28] sm:$0xff]
        %v714 = vld [vmem:[#allocation2 + $0x30] sm:$0xff]
        %v715 = vld [vmem:[#allocation2 + $0x38] sm:$0xff]
        %v716 = vld [vmem:[#allocation2 + $0x40] sm:$0xff]
        %v717 = vld [vmem:[#allocation2 + $0x48] sm:$0xff]
        %v718 = vld [vmem:[#allocation2 + $0x50] sm:$0xff]
        %v719 = vld [vmem:[#allocation2 + $0x58] sm:$0xff]
        %v720 = vld [vmem:[#allocation2 + $0x60] sm:$0xff]
        %v721 = vld [vmem:[#allocation2 + $0x68] sm:$0xff]
        %v722 = vld [vmem:[#allocation2 + $0x70] sm:$0xff]
        %v723 = vld [vmem:[#allocation2 + $0x78] sm:$0xff]
        %v724 = vld [vmem:[#allocation2 + $0x80] sm:$0xff]
        %v725 = vld [vmem:[#allocation2 + $0x88] sm:$0xff]
        %v726 = vld [vmem:[#allocation2 + $0x90] sm:$0xff]
        %v727 = vld [vmem:[#allocation2 + $0x98] sm:$0xff]
        %v728 = vld [vmem:[#allocation2 + $0xa0] sm:$0xff]
        %v729 = vld [vmem:[#allocation2 + $0xa8] sm:$0xff]
        %v730 = vld [vmem:[#allocation2 + $0xb0] sm:$0xff]
        %v731 = vld [vmem:[#allocation2 + $0xb8] sm:$0xff]
        %v732 = vld [vmem:[#allocation2 + $0xc0] sm:$0xff]
        %v733 = vld [vmem:[#allocation2 + $0xc8] sm:$0xff]
        %v734 = vld [vmem:[#allocation2 + $0xd0] sm:$0xff]
        %v735 = vld [vmem:[#allocation2 + $0xd8] sm:$0xff]
        %v736 = vld [vmem:[#allocation2 + $0xe0] sm:$0xff]
        %v737 = vld [vmem:[#allocation2 + $0xe8] sm:$0xff]
        %v738 = vld [vmem:[#allocation2 + $0xf0] sm:$0xff]
        %v739 = vld [vmem:[#allocation2 + $0xf8] sm:$0xff]
        %v740 = vld [vmem:[#allocation2 + $0x100] sm:$0xff]
        %v741 = vld [vmem:[#allocation2 + $0x108] sm:$0xff]
        %v742 = vld [vmem:[#allocation2 + $0x110] sm:$0xff]
        %v743 = vld [vmem:[#allocation2 + $0x118] sm:$0xff]
        %v744 = vld [vmem:[#allocation2 + $0x120] sm:$0xff]
        %v745 = vld [vmem:[#allocation2 + $0x128] sm:$0xff]
        %v746 = vld [vmem:[#allocation2 + $0x130] sm:$0xff]
        %v747 = vld [vmem:[#allocation2 + $0x138] sm:$0xff]
        %v748 = vld [vmem:[%s248] sm:$0xff]
        %v749 = vld [vmem:[%s248 + $0x8] sm:$0xff]
        %v750 = vld [vmem:[%s248 + $0x10] sm:$0xff]
        %v751 = vld [vmem:[%s248 + $0x18] sm:$0xff]
        %v752 = vld [vmem:[%s248 + $0x20] sm:$0xff]
        %v753 = vld [vmem:[%s248 + $0x28] sm:$0xff]
        %v754 = vld [vmem:[%s248 + $0x30] sm:$0xff]
        %v755 = vld [vmem:[%s248 + $0x38] sm:$0xff]
        %v756 = vld [vmem:[%s248 + $0x40] sm:$0xff]
        %v757 = vld [vmem:[%s248 + $0x48] sm:$0xff]
        %v758 = vld [vmem:[%s248 + $0x50] sm:$0xff]
        %v759 = vld [vmem:[%s248 + $0x58] sm:$0xff]
        %v760 = vld [vmem:[%s248 + $0x60] sm:$0xff]
        %v761 = vld [vmem:[%s248 + $0x68] sm:$0xff]
        %v762 = vld [vmem:[%s248 + $0x70] sm:$0xff]
        %v763 = vld [vmem:[%s248 + $0x78] sm:$0xff]
        %v764 = vld [vmem:[%s248 + $0x80] sm:$0xff]
        %v765 = vld [vmem:[%s248 + $0x88] sm:$0xff]
        %v766 = vld [vmem:[%s248 + $0x90] sm:$0xff]
        %v767 = vld [vmem:[%s248 + $0x98] sm:$0xff]
        %v768 = vld [vmem:[%s248 + $0xa0] sm:$0xff]
        %v769 = vld [vmem:[%s248 + $0xa8] sm:$0xff]
        %v770 = vld [vmem:[%s248 + $0xb0] sm:$0xff]
        %v771 = vld [vmem:[%s248 + $0xb8] sm:$0xff]
        %v772 = vld [vmem:[%s248 + $0xc0] sm:$0xff]
        %v773 = vld [vmem:[%s248 + $0xc8] sm:$0xff]
        %v774 = vld [vmem:[%s248 + $0xd0] sm:$0xff]
        %v775 = vld [vmem:[%s248 + $0xd8] sm:$0xff]
        %v776 = vld [vmem:[%s248 + $0xe0] sm:$0xff]
        %v777 = vld [vmem:[%s248 + $0xe8] sm:$0xff]
        %v778 = vld [vmem:[%s248 + $0xf0] sm:$0xff]
        %v779 = vld [vmem:[%s248 + $0xf8] sm:$0xff]
        %v780 = vld [vmem:[%s248 + $0x100] sm:$0xff]
        %v781 = vld [vmem:[%s248 + $0x108] sm:$0xff]
        %v782 = vld [vmem:[%s248 + $0x110] sm:$0xff]
        %v783 = vld [vmem:[%s248 + $0x118] sm:$0xff]
        %v784 = vld [vmem:[%s248 + $0x120] sm:$0xff]
        %v785 = vld [vmem:[%s248 + $0x128] sm:$0xff]
        %v786 = vld [vmem:[%s248 + $0x130] sm:$0xff]
        %v787 = vld [vmem:[%s248 + $0x138] sm:$0xff]
        %v788 = vld [vmem:[%s248 + $0x140] sm:$0xff]
        %v789 = vld [vmem:[%s248 + $0x148] sm:$0xff]
        %v790 = vld [vmem:[%s248 + $0x150] sm:$0xff]
        %v791 = vld [vmem:[%s248 + $0x158] sm:$0xff]
        %v792 = vld [vmem:[%s248 + $0x160] sm:$0xff]
        %v793 = vld [vmem:[%s248 + $0x168] sm:$0xff]
        %v794 = vld [vmem:[%s248 + $0x170] sm:$0xff]
        %v795 = vld [vmem:[%s248 + $0x178] sm:$0xff]
        %v796 = vld [vmem:[%s248 + $0x180] sm:$0xff]
        %v797 = vld [vmem:[%s248 + $0x188] sm:$0xff]
        %v798 = vld [vmem:[%s248 + $0x190] sm:$0xff]
        %v799 = vld [vmem:[%s248 + $0x198] sm:$0xff]
        %v800 = vld [vmem:[%s248 + $0x1a0] sm:$0xff]
        %v801 = vld [vmem:[%s248 + $0x1a8] sm:$0xff]
        %v802 = vld [vmem:[%s248 + $0x1b0] sm:$0xff]
        %v803 = vld [vmem:[%s248 + $0x1b8] sm:$0xff]
        %v804 = vld [vmem:[%s248 + $0x1c0] sm:$0xff]
        %v805 = vld [vmem:[%s248 + $0x1c8] sm:$0xff]
        %v806 = vld [vmem:[%s248 + $0x1d0] sm:$0xff]
        %v807 = vld [vmem:[%s248 + $0x1d8] sm:$0xff]
        %v808 = vld [vmem:[%s248 + $0x1e0] sm:$0xff]
        %v809 = vld [vmem:[%s248 + $0x1e8] sm:$0xff]
        %v810 = vld [vmem:[%s248 + $0x1f0] sm:$0xff]
        %v811 = vld [vmem:[%s248 + $0x1f8] sm:$0xff]
        %v812 = vld [vmem:[%s248 + $0x200] sm:$0xff]
        %v813 = vld [vmem:[%s248 + $0x208] sm:$0xff]
        %v814 = vld [vmem:[%s248 + $0x210] sm:$0xff]
        %v815 = vld [vmem:[%s248 + $0x218] sm:$0xff]
        %v816 = vld [vmem:[%s248 + $0x220] sm:$0xff]
        %v817 = vld [vmem:[%s248 + $0x228] sm:$0xff]
        %v818 = vld [vmem:[%s248 + $0x230] sm:$0xff]
        %v819 = vld [vmem:[%s248 + $0x238] sm:$0xff]
        %v820 = vld [vmem:[%s248 + $0x240] sm:$0xff]
        %v821 = vld [vmem:[%s248 + $0x248] sm:$0xff]
        %v822 = vld [vmem:[%s248 + $0x250] sm:$0xff]
        %v823 = vld [vmem:[%s248 + $0x258] sm:$0xff]
        %v824 = vld [vmem:[%s248 + $0x260] sm:$0xff]
        %v825 = vld [vmem:[%s248 + $0x268] sm:$0xff]
        %v826 = vld [vmem:[%s248 + $0x270] sm:$0xff]
        %v827 = vld [vmem:[%s248 + $0x278] sm:$0xff]
        %828 = vxpose.xlu0.b32.start [1/16] %v628, 128
        %829 = vxpose.xlu0.b32.cont [2/16] %v630, 128
        %830 = vxpose.xlu0.b32.cont [3/16] %v632, 128
        %831 = vxpose.xlu0.b32.cont [4/16] %v634, 128
        %832 = vxpose.xlu0.b32.cont [5/16] %v636, 128
        %833 = vxpose.xlu0.b32.cont [6/16] %v638, 128
        %834 = vxpose.xlu0.b32.cont [7/16] %v640, 128
        %835 = vxpose.xlu0.b32.cont [8/16] %v642, 128
        %836 = vxpose.xlu0.b32.cont [9/16] %v644, 128
        %837 = vxpose.xlu0.b32.cont [10/16] %v646, 128
        %838 = vxpose.xlu0.b32.cont [11/16] %v648, 128
        %839 = vxpose.xlu0.b32.cont [12/16] %v650, 128
        %840 = vxpose.xlu0.b32.cont [13/16] %v652, 128
        %841 = vxpose.xlu0.b32.cont [14/16] %v654, 128
        %842 = vxpose.xlu0.b32.cont [15/16] %v656, 128
        %843 = vxpose.xlu0.b32.end [16/16] %v658, 128
        %v844 = vpop.trf.xlu0
        %v845 = vpop.trf.xlu0
        %v846 = vpop.trf.xlu0
        %v847 = vpop.trf.xlu0
        %v848 = vpop.trf.xlu0
        %v849 = vpop.trf.xlu0
        %v850 = vpop.trf.xlu0
        %v851 = vpop.trf.xlu0
        %v852 = vpop.trf.xlu0
        %v853 = vpop.trf.xlu0
        %v854 = vpop.trf.xlu0
        %v855 = vpop.trf.xlu0
        %v856 = vpop.trf.xlu0
        %v857 = vpop.trf.xlu0
        %v858 = vpop.trf.xlu0
        %v859 = vpop.trf.xlu0
        %860 = vxpose.xlu0.b32.start [1/16] %v629, 128
        %861 = vxpose.xlu0.b32.cont [2/16] %v631, 128
        %862 = vxpose.xlu0.b32.cont [3/16] %v633, 128
        %863 = vxpose.xlu0.b32.cont [4/16] %v635, 128
        %864 = vxpose.xlu0.b32.cont [5/16] %v637, 128
        %865 = vxpose.xlu0.b32.cont [6/16] %v639, 128
        %866 = vxpose.xlu0.b32.cont [7/16] %v641, 128
        %867 = vxpose.xlu0.b32.cont [8/16] %v643, 128
        %868 = vxpose.xlu0.b32.cont [9/16] %v645, 128
        %869 = vxpose.xlu0.b32.cont [10/16] %v647, 128
        %870 = vxpose.xlu0.b32.cont [11/16] %v649, 128
        %871 = vxpose.xlu0.b32.cont [12/16] %v651, 128
        %872 = vxpose.xlu0.b32.cont [13/16] %v653, 128
        %873 = vxpose.xlu0.b32.cont [14/16] %v655, 128
        %874 = vxpose.xlu0.b32.cont [15/16] %v657, 128
        %875 = vxpose.xlu0.b32.end [16/16] %v659, 128
        %v876 = vpop.trf.xlu0
        %v877 = vpop.trf.xlu0
        %v878 = vpop.trf.xlu0
        %v879 = vpop.trf.xlu0
        %v880 = vpop.trf.xlu0
        %v881 = vpop.trf.xlu0
        %v882 = vpop.trf.xlu0
        %v883 = vpop.trf.xlu0
        %v884 = vpop.trf.xlu0
        %v885 = vpop.trf.xlu0
        %v886 = vpop.trf.xlu0
        %v887 = vpop.trf.xlu0
        %v888 = vpop.trf.xlu0
        %v889 = vpop.trf.xlu0
        %v890 = vpop.trf.xlu0
        %v891 = vpop.trf.xlu0
        %892 = vxpose.xlu0.b32.start [1/16] %v660, 128
        %893 = vxpose.xlu0.b32.cont [2/16] %v662, 128
        %894 = vxpose.xlu0.b32.cont [3/16] %v664, 128
        %895 = vxpose.xlu0.b32.cont [4/16] %v666, 128
        %896 = vxpose.xlu0.b32.cont [5/16] %v668, 128
        %897 = vxpose.xlu0.b32.cont [6/16] %v670, 128
        %898 = vxpose.xlu0.b32.cont [7/16] %v672, 128
        %899 = vxpose.xlu0.b32.cont [8/16] %v674, 128
        %900 = vxpose.xlu0.b32.cont [9/16] %v676, 128
        %901 = vxpose.xlu0.b32.cont [10/16] %v678, 128
        %902 = vxpose.xlu0.b32.cont [11/16] %v680, 128
        %903 = vxpose.xlu0.b32.cont [12/16] %v682, 128
        %904 = vxpose.xlu0.b32.cont [13/16] %v684, 128
        %905 = vxpose.xlu0.b32.cont [14/16] %v686, 128
        %906 = vxpose.xlu0.b32.cont [15/16] %v688, 128
        %907 = vxpose.xlu0.b32.end [16/16] %v690, 128
        %v908 = vpop.trf.xlu0
        %v909 = vpop.trf.xlu0
        %v910 = vpop.trf.xlu0
        %v911 = vpop.trf.xlu0
        %v912 = vpop.trf.xlu0
        %v913 = vpop.trf.xlu0
        %v914 = vpop.trf.xlu0
        %v915 = vpop.trf.xlu0
        %v916 = vpop.trf.xlu0
        %v917 = vpop.trf.xlu0
        %v918 = vpop.trf.xlu0
        %v919 = vpop.trf.xlu0
        %v920 = vpop.trf.xlu0
        %v921 = vpop.trf.xlu0
        %v922 = vpop.trf.xlu0
        %v923 = vpop.trf.xlu0
        %924 = vxpose.xlu0.b32.start [1/16] %v661, 128
        %925 = vxpose.xlu0.b32.cont [2/16] %v663, 128
        %926 = vxpose.xlu0.b32.cont [3/16] %v665, 128
        %927 = vxpose.xlu0.b32.cont [4/16] %v667, 128
        %928 = vxpose.xlu0.b32.cont [5/16] %v669, 128
        %929 = vxpose.xlu0.b32.cont [6/16] %v671, 128
        %930 = vxpose.xlu0.b32.cont [7/16] %v673, 128
        %931 = vxpose.xlu0.b32.cont [8/16] %v675, 128
        %932 = vxpose.xlu0.b32.cont [9/16] %v677, 128
        %933 = vxpose.xlu0.b32.cont [10/16] %v679, 128
        %934 = vxpose.xlu0.b32.cont [11/16] %v681, 128
        %935 = vxpose.xlu0.b32.cont [12/16] %v683, 128
        %936 = vxpose.xlu0.b32.cont [13/16] %v685, 128
        %937 = vxpose.xlu0.b32.cont [14/16] %v687, 128
        %938 = vxpose.xlu0.b32.cont [15/16] %v689, 128
        %939 = vxpose.xlu0.b32.end [16/16] %v691, 128
        %v940 = vpop.trf.xlu0
        %v941 = vpop.trf.xlu0
        %v942 = vpop.trf.xlu0
        %v943 = vpop.trf.xlu0
        %v944 = vpop.trf.xlu0
        %v945 = vpop.trf.xlu0
        %v946 = vpop.trf.xlu0
        %v947 = vpop.trf.xlu0
        %v948 = vpop.trf.xlu0
        %v949 = vpop.trf.xlu0
        %v950 = vpop.trf.xlu0
        %v951 = vpop.trf.xlu0
        %v952 = vpop.trf.xlu0
        %v953 = vpop.trf.xlu0
        %v954 = vpop.trf.xlu0
        %v955 = vpop.trf.xlu0
        %956 = vxpose.xlu0.b32.start [1/16] %v692, 128
        %957 = vxpose.xlu0.b32.cont [2/16] %v694, 128
        %958 = vxpose.xlu0.b32.cont [3/16] %v696, 128
        %959 = vxpose.xlu0.b32.cont [4/16] %v698, 128
        %960 = vxpose.xlu0.b32.cont [5/16] %v700, 128
        %961 = vxpose.xlu0.b32.cont [6/16] %v702, 128
        %962 = vxpose.xlu0.b32.cont [7/16] %v704, 128
        %963 = vxpose.xlu0.b32.cont [8/16] %v706, 128
        %964 = vxpose.xlu0.b32.cont [9/16] 0.0, 128
        %965 = vxpose.xlu0.b32.cont [10/16] 0.0, 128
        %966 = vxpose.xlu0.b32.cont [11/16] 0.0, 128
        %967 = vxpose.xlu0.b32.cont [12/16] 0.0, 128
        %968 = vxpose.xlu0.b32.cont [13/16] 0.0, 128
        %969 = vxpose.xlu0.b32.cont [14/16] 0.0, 128
        %970 = vxpose.xlu0.b32.cont [15/16] 0.0, 128
        %971 = vxpose.xlu0.b32.end [16/16] 0.0, 128
        %v972 = vpop.trf.xlu0
        %v973 = vpop.trf.xlu0
        %v974 = vpop.trf.xlu0
        %v975 = vpop.trf.xlu0
        %v976 = vpop.trf.xlu0
        %v977 = vpop.trf.xlu0
        %v978 = vpop.trf.xlu0
        %v979 = vpop.trf.xlu0
        %v980 = vpop.trf.xlu0
        %v981 = vpop.trf.xlu0
        %v982 = vpop.trf.xlu0
        %v983 = vpop.trf.xlu0
        %v984 = vpop.trf.xlu0
        %v985 = vpop.trf.xlu0
        %v986 = vpop.trf.xlu0
        %v987 = vpop.trf.xlu0
        %988 = vxpose.xlu0.b32.start [1/16] %v693, 128
        %989 = vxpose.xlu0.b32.cont [2/16] %v695, 128
        %990 = vxpose.xlu0.b32.cont [3/16] %v697, 128
        %991 = vxpose.xlu0.b32.cont [4/16] %v699, 128
        %992 = vxpose.xlu0.b32.cont [5/16] %v701, 128
        %993 = vxpose.xlu0.b32.cont [6/16] %v703, 128
        %994 = vxpose.xlu0.b32.cont [7/16] %v705, 128
        %995 = vxpose.xlu0.b32.cont [8/16] %v707, 128
        %996 = vxpose.xlu0.b32.cont [9/16] 0.0, 128
        %997 = vxpose.xlu0.b32.cont [10/16] 0.0, 128
        %998 = vxpose.xlu0.b32.cont [11/16] 0.0, 128
        %999 = vxpose.xlu0.b32.cont [12/16] 0.0, 128
        %1000 = vxpose.xlu0.b32.cont [13/16] 0.0, 128
        %1001 = vxpose.xlu0.b32.cont [14/16] 0.0, 128
        %1002 = vxpose.xlu0.b32.cont [15/16] 0.0, 128
        %1003 = vxpose.xlu0.b32.end [16/16] 0.0, 128
        %v1004 = vpop.trf.xlu0
        %v1005 = vpop.trf.xlu0
        %v1006 = vpop.trf.xlu0
        %v1007 = vpop.trf.xlu0
        %v1008 = vpop.trf.xlu0
        %v1009 = vpop.trf.xlu0
        %v1010 = vpop.trf.xlu0
        %v1011 = vpop.trf.xlu0
        %v1012 = vpop.trf.xlu0
        %v1013 = vpop.trf.xlu0
        %v1014 = vpop.trf.xlu0
        %v1015 = vpop.trf.xlu0
        %v1016 = vpop.trf.xlu0
        %v1017 = vpop.trf.xlu0
        %v1018 = vpop.trf.xlu0
        %v1019 = vpop.trf.xlu0
        %vm1020 = vcmask 523264
        %v1022 = vsel %vm1020, %v972, 0
        %v1025 = vsel %vm1020, %v973, 0
        %v1028 = vsel %vm1020, %v974, 0
        %v1031 = vsel %vm1020, %v975, 0
        %v1034 = vsel %vm1020, %v976, 0
        %v1037 = vsel %vm1020, %v977, 0
        %v1040 = vsel %vm1020, %v978, 0
        %v1043 = vsel %vm1020, %v979, 0
        %v1046 = vsel %vm1020, %v980, 0
        %v1049 = vsel %vm1020, %v981, 0
        %v1052 = vsel %vm1020, %v982, 0
        %v1055 = vsel %vm1020, %v983, 0
        %v1058 = vsel %vm1020, %v984, 0
        %v1061 = vsel %vm1020, %v985, 0
        %v1064 = vsel %vm1020, %v986, 0
        %v1067 = vsel %vm1020, %v987, 0
        %v1070 = vsel %vm1020, %v1004, 0
        %v1073 = vsel %vm1020, %v1005, 0
        %v1076 = vsel %vm1020, %v1006, 0
        %v1079 = vsel %vm1020, %v1007, 0
        %1081 = vmatprep.subr.mxu0 %v749
        %1082 = vmatpush1.msra.mxu0 %v748
        %1083 = vmatprep.subr.mxu0 %v751
        %1084 = vmatpush1.msra.mxu0 %v750
        %1085 = vmatprep.subr.mxu0 %v753
        %1086 = vmatpush1.msra.mxu0 %v752
        %1087 = vmatprep.subr.mxu0 %v755
        %1088 = vmatpush1.msra.mxu0 %v754
        %1089 = vmatprep.subr.mxu0 %v757
        %1090 = vmatpush1.msra.mxu0 %v756
        %1091 = vmatprep.subr.mxu0 %v759
        %1092 = vmatpush1.msra.mxu0 %v758
        %1093 = vmatprep.subr.mxu0 %v761
        %1094 = vmatpush1.msra.mxu0 %v760
        %1095 = vmatprep.subr.mxu0 %v763
        %1096 = vmatpush1.msra.mxu0 %v762
        %1097 = vmatprep.subr.mxu0 %v765
        %1098 = vmatpush1.msra.mxu0 %v764
        %1099 = vmatprep.subr.mxu0 %v767
        %1100 = vmatpush1.msra.mxu0 %v766
        %1101 = vmatprep.subr.mxu0 %v769
        %1102 = vmatpush1.msra.mxu0 %v768
        %1103 = vmatprep.subr.mxu0 %v771
        %1104 = vmatpush1.msra.mxu0 %v770
        %1105 = vmatprep.subr.mxu0 %v773
        %1106 = vmatpush1.msra.mxu0 %v772
        %1107 = vmatprep.subr.mxu0 %v775
        %1108 = vmatpush1.msra.mxu0 %v774
        %1109 = vmatprep.subr.mxu0 %v777
        %1110 = vmatpush1.msra.mxu0 %v776
        %1111 = vmatprep.subr.mxu0 %v779
        %1112 = vmatpush1.msra.mxu0 %v778
        %1113 = vmatprep.subr.mxu0 %v781
        %1114 = vmatpush1.msra.mxu0 %v780
        %1115 = vmatprep.subr.mxu0 %v783
        %1116 = vmatpush1.msra.mxu0 %v782
        %1117 = vmatprep.subr.mxu0 %v785
        %1118 = vmatpush1.msra.mxu0 %v784
        %1119 = vmatprep.subr.mxu0 %v787
        %1120 = vmatpush1.msra.mxu0 %v786
        %1121 = vmatprep.subr.mxu0 %v789
        %1122 = vmatpush1.msra.mxu0 %v788
        %1123 = vmatprep.subr.mxu0 %v791
        %1124 = vmatpush1.msra.mxu0 %v790
        %1125 = vmatprep.subr.mxu0 %v793
        %1126 = vmatpush1.msra.mxu0 %v792
        %1127 = vmatprep.subr.mxu0 %v795
        %1128 = vmatpush1.msra.mxu0 %v794
        %1129 = vmatprep.subr.mxu0 %v797
        %1130 = vmatpush1.msra.mxu0 %v796
        %1131 = vmatprep.subr.mxu0 %v799
        %1132 = vmatpush1.msra.mxu0 %v798
        %1133 = vmatprep.subr.mxu0 %v801
        %1134 = vmatpush1.msra.mxu0 %v800
        %1135 = vmatprep.subr.mxu0 %v803
        %1136 = vmatpush1.msra.mxu0 %v802
        %1137 = vmatprep.subr.mxu0 %v805
        %1138 = vmatpush1.msra.mxu0 %v804
        %1139 = vmatprep.subr.mxu0 %v807
        %1140 = vmatpush1.msra.mxu0 %v806
        %1141 = vmatprep.subr.mxu0 %v809
        %1142 = vmatpush1.msra.mxu0 %v808
        %1143 = vmatprep.subr.mxu0 %v811
        %1144 = vmatpush1.msra.mxu0 %v810
        %1145 = vmatprep.mubr.f32.mxu0 %v908
        %1146 = vmatmul.mubr.f32.gmra.mrb[0].mxu0 %v844
        %v1147 = vpop.f32.mrb[0].mxu0
        %v1148 = vadd.f32 0.0, %v1147
        %v1149 = vpop.f32.mrb[0].mxu0
        %v1150 = vadd.f32 0.0, %v1149
        %1151 = vmatprep.mubr.f32.mxu0 %v909
        %1152 = vmatmul.mubr.f32.gmra.mrb[0].mxu0 %v845
        %v1153 = vpop.f32.mrb[0].mxu0
        %v1154 = vadd.f32 0.0, %v1153
        %v1155 = vpop.f32.mrb[0].mxu0
        %v1156 = vadd.f32 0.0, %v1155
        %1157 = vmatprep.mubr.f32.mxu0 %v910
        %1158 = vmatmul.mubr.f32.gmra.mrb[0].mxu0 %v846
        %v1159 = vpop.f32.mrb[0].mxu0
        %v1160 = vadd.f32 0.0, %v1159
        %v1161 = vpop.f32.mrb[0].mxu0
        %v1162 = vadd.f32 0.0, %v1161
        %1163 = vmatprep.mubr.f32.mxu0 %v911
        %1164 = vmatmul.mubr.f32.gmra.mrb[0].mxu0 %v847
        %v1165 = vpop.f32.mrb[0].mxu0
        %v1166 = vadd.f32 0.0, %v1165
        %v1167 = vpop.f32.mrb[0].mxu0
        %v1168 = vadd.f32 0.0, %v1167
        %1169 = vmatprep.mubr.f32.mxu0 %v912
        %1170 = vmatmul.mubr.f32.gmra.mrb[0].mxu0 %v848
        %v1171 = vpop.f32.mrb[0].mxu0
        %v1172 = vadd.f32 0.0, %v1171
        %v1173 = vpop.f32.mrb[0].mxu0
        %v1174 = vadd.f32 0.0, %v1173
        %1175 = vmatprep.mubr.f32.mxu0 %v913
        %1176 = vmatmul.mubr.f32.gmra.mrb[0].mxu0 %v849
        %v1177 = vpop.f32.mrb[0].mxu0
        %v1178 = vadd.f32 0.0, %v1177
        %v1179 = vpop.f32.mrb[0].mxu0
        %v1180 = vadd.f32 0.0, %v1179
        %1181 = vmatprep.mubr.f32.mxu0 %v914
        %1182 = vmatmul.mubr.f32.gmra.mrb[0].mxu0 %v850
        %v1183 = vpop.f32.mrb[0].mxu0
        %v1184 = vadd.f32 0.0, %v1183
        %v1185 = vpop.f32.mrb[0].mxu0
        %v1186 = vadd.f32 0.0, %v1185
        %1187 = vmatprep.mubr.f32.mxu0 %v915
        %1188 = vmatmul.mubr.f32.gmra.mrb[0].mxu0 %v851
        %v1189 = vpop.f32.mrb[0].mxu0
        %v1190 = vadd.f32 0.0, %v1189
        %v1191 = vpop.f32.mrb[0].mxu0
        %v1192 = vadd.f32 0.0, %v1191
        %1193 = vmatprep.mubr.f32.mxu0 %v916
        %1194 = vmatmul.mubr.f32.gmra.mrb[0].mxu0 %v852
        %v1195 = vpop.f32.mrb[0].mxu0
        %v1196 = vadd.f32 0.0, %v1195
        %v1197 = vpop.f32.mrb[0].mxu0
        %v1198 = vadd.f32 0.0, %v1197
        %1199 = vmatprep.mubr.f32.mxu0 %v917
        %1200 = vmatmul.mubr.f32.gmra.mrb[0].mxu0 %v853
        %v1201 = vpop.f32.mrb[0].mxu0
        %v1202 = vadd.f32 0.0, %v1201
        %v1203 = vpop.f32.mrb[0].mxu0
        %v1204 = vadd.f32 0.0, %v1203
        %1205 = vmatprep.mubr.f32.mxu0 %v918
        %1206 = vmatmul.mubr.f32.gmra.mrb[0].mxu0 %v854
        %v1207 = vpop.f32.mrb[0].mxu0
        %v1208 = vadd.f32 0.0, %v1207
        %v1209 = vpop.f32.mrb[0].mxu0
        %v1210 = vadd.f32 0.0, %v1209
        %1211 = vmatprep.mubr.f32.mxu0 %v919
        %1212 = vmatmul.mubr.f32.gmra.mrb[0].mxu0 %v855
        %v1213 = vpop.f32.mrb[0].mxu0
        %v1214 = vadd.f32 0.0, %v1213
        %v1215 = vpop.f32.mrb[0].mxu0
        %v1216 = vadd.f32 0.0, %v1215
        %1217 = vmatprep.mubr.f32.mxu0 %v920
        %1218 = vmatmul.mubr.f32.gmra.mrb[0].mxu0 %v856
        %v1219 = vpop.f32.mrb[0].mxu0
        %v1220 = vadd.f32 0.0, %v1219
        %v1221 = vpop.f32.mrb[0].mxu0
        %v1222 = vadd.f32 0.0, %v1221
        %1223 = vmatprep.mubr.f32.mxu0 %v921
        %1224 = vmatmul.mubr.f32.gmra.mrb[0].mxu0 %v857
        %v1225 = vpop.f32.mrb[0].mxu0
        %v1226 = vadd.f32 0.0, %v1225
        %v1227 = vpop.f32.mrb[0].mxu0
        %v1228 = vadd.f32 0.0, %v1227
        %1229 = vmatprep.mubr.f32.mxu0 %v922
        %1230 = vmatmul.mubr.f32.gmra.mrb[0].mxu0 %v858
        %v1231 = vpop.f32.mrb[0].mxu0
        %v1232 = vadd.f32 0.0, %v1231
        %v1233 = vpop.f32.mrb[0].mxu0
        %v1234 = vadd.f32 0.0, %v1233
        %1235 = vmatprep.mubr.f32.mxu0 %v923
        %1236 = vmatmul.mubr.f32.gmra.mrb[0].mxu0 %v859
        %v1237 = vpop.f32.mrb[0].mxu0
        %v1238 = vadd.f32 0.0, %v1237
        %v1239 = vpop.f32.mrb[0].mxu0
        %v1240 = vadd.f32 0.0, %v1239
        %1241 = vmatprep.mubr.f32.mxu0 %v940
        %1242 = vmatmul.mubr.f32.gmra.mrb[0].mxu0 %v876
        %v1243 = vpop.f32.mrb[0].mxu0
        %v1244 = vadd.f32 0.0, %v1243
        %v1245 = vpop.f32.mrb[0].mxu0
        %v1246 = vadd.f32 0.0, %v1245
        %1247 = vmatprep.mubr.f32.mxu0 %v941
        %1248 = vmatmul.mubr.f32.gmra.mrb[0].mxu0 %v877
        %v1249 = vpop.f32.mrb[0].mxu0
        %v1250 = vadd.f32 0.0, %v1249
        %v1251 = vpop.f32.mrb[0].mxu0
        %v1252 = vadd.f32 0.0, %v1251
        %1253 = vmatprep.mubr.f32.mxu0 %v942
        %1254 = vmatmul.mubr.f32.gmra.mrb[0].mxu0 %v878
        %v1255 = vpop.f32.mrb[0].mxu0
        %v1256 = vadd.f32 0.0, %v1255
        %v1257 = vpop.f32.mrb[0].mxu0
        %v1258 = vadd.f32 0.0, %v1257
        %1259 = vmatprep.mubr.f32.mxu0 %v943
        %1260 = vmatmul.mubr.f32.gmra.mrb[0].mxu0 %v879
        %v1261 = vpop.f32.mrb[0].mxu0
        %v1262 = vadd.f32 0.0, %v1261
        %v1263 = vpop.f32.mrb[0].mxu0
        %v1264 = vadd.f32 0.0, %v1263
        %1265 = vdwg.mxu0
        %1266 = vmatprep.subr.mxu0 %v813
        %1267 = vmatpush1.msra.mxu0 %v812
        %1268 = vmatprep.subr.mxu0 %v815
        %1269 = vmatpush1.msra.mxu0 %v814
        %1270 = vmatprep.subr.mxu0 %v817
        %1271 = vmatpush1.msra.mxu0 %v816
        %1272 = vmatprep.subr.mxu0 %v819
        %1273 = vmatpush1.msra.mxu0 %v818
        %1274 = vmatprep.subr.mxu0 %v821
        %1275 = vmatpush1.msra.mxu0 %v820
        %1276 = vmatprep.subr.mxu0 %v823
        %1277 = vmatpush1.msra.mxu0 %v822
        %1278 = vmatprep.subr.mxu0 %v825
        %1279 = vmatpush1.msra.mxu0 %v824
        %1280 = vmatprep.subr.mxu0 %v827
        %1281 = vmatpush1.msra.mxu0 %v826
        %1282 = vmatprep.subr.mxu0 0.0
        %1283 = vmatpush1.msra.mxu0 0.0
        %1284 = vmatprep.subr.mxu0 0.0
        %1285 = vmatpush1.msra.mxu0 0.0
        %1286 = vmatprep.subr.mxu0 0.0
        %1287 = vmatpush1.msra.mxu0 0.0
        %1288 = vmatprep.subr.mxu0 0.0
        %1289 = vmatpush1.msra.mxu0 0.0
        %1290 = vmatprep.subr.mxu0 0.0
        %1291 = vmatpush1.msra.mxu0 0.0
        %1292 = vmatprep.subr.mxu0 0.0
        %1293 = vmatpush1.msra.mxu0 0.0
        %1294 = vmatprep.subr.mxu0 0.0
        %1295 = vmatpush1.msra.mxu0 0.0
        %1296 = vmatprep.subr.mxu0 0.0
        %1297 = vmatpush1.msra.mxu0 0.0
        %1298 = vmatprep.subr.mxu0 0.0
        %1299 = vmatpush1.msra.mxu0 0.0
        %1300 = vmatprep.subr.mxu0 0.0
        %1301 = vmatpush1.msra.mxu0 0.0
        %1302 = vmatprep.subr.mxu0 0.0
        %1303 = vmatpush1.msra.mxu0 0.0
        %1304 = vmatprep.subr.mxu0 0.0
        %1305 = vmatpush1.msra.mxu0 0.0
        %1306 = vmatprep.subr.mxu0 0.0
        %1307 = vmatpush1.msra.mxu0 0.0
        %1308 = vmatprep.subr.mxu0 0.0
        %1309 = vmatpush1.msra.mxu0 0.0
        %1310 = vmatprep.subr.mxu0 0.0
        %1311 = vmatpush1.msra.mxu0 0.0
        %1312 = vmatprep.subr.mxu0 0.0
        %1313 = vmatpush1.msra.mxu0 0.0
        %1314 = vmatprep.subr.mxu0 0.0
        %1315 = vmatpush1.msra.mxu0 0.0
        %1316 = vmatprep.subr.mxu0 0.0
        %1317 = vmatpush1.msra.mxu0 0.0
        %1318 = vmatprep.subr.mxu0 0.0
        %1319 = vmatpush1.msra.mxu0 0.0
        %1320 = vmatprep.subr.mxu0 0.0
        %1321 = vmatpush1.msra.mxu0 0.0
        %1322 = vmatprep.subr.mxu0 0.0
        %1323 = vmatpush1.msra.mxu0 0.0
        %1324 = vmatprep.subr.mxu0 0.0
        %1325 = vmatpush1.msra.mxu0 0.0
        %1326 = vmatprep.subr.mxu0 0.0
        %1327 = vmatpush1.msra.mxu0 0.0
        %1328 = vmatprep.subr.mxu0 0.0
        %1329 = vmatpush1.msra.mxu0 0.0
        %1330 = vmatprep.mubr.f32.mxu0 0.0
        %1331 = vmatmul.mubr.f32.gmra.mrb[0].mxu0 %v1022
        %v1332 = vpop.f32.mrb[0].mxu0
        %v1333 = vadd.f32 %v1148, %v1332
        %v1334 = vpop.f32.mrb[0].mxu0
        %v1335 = vadd.f32 %v1150, %v1334
        %1336 = vmatprep.mubr.f32.mxu0 0.0
        %1337 = vmatmul.mubr.f32.gmra.mrb[0].mxu0 %v1025
        %v1338 = vpop.f32.mrb[0].mxu0
        %v1339 = vadd.f32 %v1154, %v1338
        %v1340 = vpop.f32.mrb[0].mxu0
        %v1341 = vadd.f32 %v1156, %v1340
        %1342 = vmatprep.mubr.f32.mxu0 0.0
        %1343 = vmatmul.mubr.f32.gmra.mrb[0].mxu0 %v1028
        %v1344 = vpop.f32.mrb[0].mxu0
        %v1345 = vadd.f32 %v1160, %v1344
        %v1346 = vpop.f32.mrb[0].mxu0
        %v1347 = vadd.f32 %v1162, %v1346
        %1348 = vmatprep.mubr.f32.mxu0 0.0
        %1349 = vmatmul.mubr.f32.gmra.mrb[0].mxu0 %v1031
        %v1350 = vpop.f32.mrb[0].mxu0
        %v1351 = vadd.f32 %v1166, %v1350
        %v1352 = vpop.f32.mrb[0].mxu0
        %v1353 = vadd.f32 %v1168, %v1352
        %1354 = vmatprep.mubr.f32.mxu0 0.0
        %1355 = vmatmul.mubr.f32.gmra.mrb[0].mxu0 %v1034
        %v1356 = vpop.f32.mrb[0].mxu0
        %v1357 = vadd.f32 %v1172, %v1356
        %v1358 = vpop.f32.mrb[0].mxu0
        %v1359 = vadd.f32 %v1174, %v1358
        %1360 = vmatprep.mubr.f32.mxu0 0.0
        %1361 = vmatmul.mubr.f32.gmra.mrb[0].mxu0 %v1037
        %v1362 = vpop.f32.mrb[0].mxu0
        %v1363 = vadd.f32 %v1178, %v1362
        %v1364 = vpop.f32.mrb[0].mxu0
        %v1365 = vadd.f32 %v1180, %v1364
        %1366 = vmatprep.mubr.f32.mxu0 0.0
        %1367 = vmatmul.mubr.f32.gmra.mrb[0].mxu0 %v1040
        %v1368 = vpop.f32.mrb[0].mxu0
        %v1369 = vadd.f32 %v1184, %v1368
        %v1370 = vpop.f32.mrb[0].mxu0
        %v1371 = vadd.f32 %v1186, %v1370
        %1372 = vmatprep.mubr.f32.mxu0 0.0
        %1373 = vmatmul.mubr.f32.gmra.mrb[0].mxu0 %v1043
        %v1374 = vpop.f32.mrb[0].mxu0
        %v1375 = vadd.f32 %v1190, %v1374
        %v1376 = vpop.f32.mrb[0].mxu0
        %v1377 = vadd.f32 %v1192, %v1376
        %1378 = vmatprep.mubr.f32.mxu0 0.0
        %1379 = vmatmul.mubr.f32.gmra.mrb[0].mxu0 %v1046
        %v1380 = vpop.f32.mrb[0].mxu0
        %v1381 = vadd.f32 %v1196, %v1380
        %v1382 = vpop.f32.mrb[0].mxu0
        %v1383 = vadd.f32 %v1198, %v1382
        %1384 = vmatprep.mubr.f32.mxu0 0.0
        %1385 = vmatmul.mubr.f32.gmra.mrb[0].mxu0 %v1049
        %v1386 = vpop.f32.mrb[0].mxu0
        %v1387 = vadd.f32 %v1202, %v1386
        %v1388 = vpop.f32.mrb[0].mxu0
        %v1389 = vadd.f32 %v1204, %v1388
        %1390 = vmatprep.mubr.f32.mxu0 0.0
        %1391 = vmatmul.mubr.f32.gmra.mrb[0].mxu0 %v1052
        %v1392 = vpop.f32.mrb[0].mxu0
        %v1393 = vadd.f32 %v1208, %v1392
        %v1394 = vpop.f32.mrb[0].mxu0
        %v1395 = vadd.f32 %v1210, %v1394
        %1396 = vmatprep.mubr.f32.mxu0 0.0
        %1397 = vmatmul.mubr.f32.gmra.mrb[0].mxu0 %v1055
        %v1398 = vpop.f32.mrb[0].mxu0
        %v1399 = vadd.f32 %v1214, %v1398
        %v1400 = vpop.f32.mrb[0].mxu0
        %v1401 = vadd.f32 %v1216, %v1400
        %1402 = vmatprep.mubr.f32.mxu0 0.0
        %1403 = vmatmul.mubr.f32.gmra.mrb[0].mxu0 %v1058
        %v1404 = vpop.f32.mrb[0].mxu0
        %v1405 = vadd.f32 %v1220, %v1404
        %v1406 = vpop.f32.mrb[0].mxu0
        %v1407 = vadd.f32 %v1222, %v1406
        %1408 = vmatprep.mubr.f32.mxu0 0.0
        %1409 = vmatmul.mubr.f32.gmra.mrb[0].mxu0 %v1061
        %v1410 = vpop.f32.mrb[0].mxu0
        %v1411 = vadd.f32 %v1226, %v1410
        %v1412 = vpop.f32.mrb[0].mxu0
        %v1413 = vadd.f32 %v1228, %v1412
        %1414 = vmatprep.mubr.f32.mxu0 0.0
        %1415 = vmatmul.mubr.f32.gmra.mrb[0].mxu0 %v1064
        %v1416 = vpop.f32.mrb[0].mxu0
        %v1417 = vadd.f32 %v1232, %v1416
        %v1418 = vpop.f32.mrb[0].mxu0
        %v1419 = vadd.f32 %v1234, %v1418
        %1420 = vmatprep.mubr.f32.mxu0 0.0
        %1421 = vmatmul.mubr.f32.gmra.mrb[0].mxu0 %v1067
        %v1422 = vpop.f32.mrb[0].mxu0
        %v1423 = vadd.f32 %v1238, %v1422
        %v1424 = vpop.f32.mrb[0].mxu0
        %v1425 = vadd.f32 %v1240, %v1424
        %1426 = vmatprep.mubr.f32.mxu0 0.0
        %1427 = vmatmul.mubr.f32.gmra.mrb[0].mxu0 %v1070
        %v1428 = vpop.f32.mrb[0].mxu0
        %v1429 = vadd.f32 %v1244, %v1428
        %v1430 = vpop.f32.mrb[0].mxu0
        %v1431 = vadd.f32 %v1246, %v1430
        %1432 = vmatprep.mubr.f32.mxu0 0.0
        %1433 = vmatmul.mubr.f32.gmra.mrb[0].mxu0 %v1073
        %v1434 = vpop.f32.mrb[0].mxu0
        %v1435 = vadd.f32 %v1250, %v1434
        %v1436 = vpop.f32.mrb[0].mxu0
        %v1437 = vadd.f32 %v1252, %v1436
        %1438 = vmatprep.mubr.f32.mxu0 0.0
        %1439 = vmatmul.mubr.f32.gmra.mrb[0].mxu0 %v1076
        %v1440 = vpop.f32.mrb[0].mxu0
        %v1441 = vadd.f32 %v1256, %v1440
        %v1442 = vpop.f32.mrb[0].mxu0
        %v1443 = vadd.f32 %v1258, %v1442
        %1444 = vmatprep.mubr.f32.mxu0 0.0
        %1445 = vmatmul.mubr.f32.gmra.mrb[0].mxu0 %v1079
        %v1446 = vpop.f32.mrb[0].mxu0
        %v1447 = vadd.f32 %v1262, %v1446
        %v1448 = vpop.f32.mrb[0].mxu0
        %v1449 = vadd.f32 %v1264, %v1448
        %1450 = vdwg.mxu0
        %v1451 = vadd.f32 %v708, %v1333
        %v1452 = vadd.f32 %v709, %v1335
        %v1453 = vadd.f32 %v710, %v1339
        %v1454 = vadd.f32 %v711, %v1341
        %v1455 = vadd.f32 %v712, %v1345
        %v1456 = vadd.f32 %v713, %v1347
        %v1457 = vadd.f32 %v714, %v1351
        %v1458 = vadd.f32 %v715, %v1353
        %v1459 = vadd.f32 %v716, %v1357
        %v1460 = vadd.f32 %v717, %v1359
        %v1461 = vadd.f32 %v718, %v1363
        %v1462 = vadd.f32 %v719, %v1365
        %v1463 = vadd.f32 %v720, %v1369
        %v1464 = vadd.f32 %v721, %v1371
        %v1465 = vadd.f32 %v722, %v1375
        %v1466 = vadd.f32 %v723, %v1377
        %v1467 = vadd.f32 %v724, %v1381
        %v1468 = vadd.f32 %v725, %v1383
        %v1469 = vadd.f32 %v726, %v1387
        %v1470 = vadd.f32 %v727, %v1389
        %v1471 = vadd.f32 %v728, %v1393
        %v1472 = vadd.f32 %v729, %v1395
        %v1473 = vadd.f32 %v730, %v1399
        %v1474 = vadd.f32 %v731, %v1401
        %v1475 = vadd.f32 %v732, %v1405
        %v1476 = vadd.f32 %v733, %v1407
        %v1477 = vadd.f32 %v734, %v1411
        %v1478 = vadd.f32 %v735, %v1413
        %v1479 = vadd.f32 %v736, %v1417
        %v1480 = vadd.f32 %v737, %v1419
        %v1481 = vadd.f32 %v738, %v1423
        %v1482 = vadd.f32 %v739, %v1425
        %v1483 = vadd.f32 %v740, %v1429
        %v1484 = vadd.f32 %v741, %v1431
        %v1485 = vadd.f32 %v742, %v1435
        %v1486 = vadd.f32 %v743, %v1437
        %v1487 = vadd.f32 %v744, %v1441
        %v1488 = vadd.f32 %v745, %v1443
        %v1489 = vadd.f32 %v746, %v1447
        %v1490 = vadd.f32 %v747, %v1449
        %1491 = vst [vmem:[#allocation2] sm:$0xff] %v1451
        %vm1492 = vcmask 556032
        %1493 = vst.msk [vmem:[#allocation2 + $0x8] sm:$0xff] %vm1492, %v1452
        %1494 = vst [vmem:[#allocation2 + $0x10] sm:$0xff] %v1453
        %1495 = vst.msk [vmem:[#allocation2 + $0x18] sm:$0xff] %vm1492, %v1454
        %1496 = vst [vmem:[#allocation2 + $0x20] sm:$0xff] %v1455
        %1497 = vst.msk [vmem:[#allocation2 + $0x28] sm:$0xff] %vm1492, %v1456
        %1498 = vst [vmem:[#allocation2 + $0x30] sm:$0xff] %v1457
        %1499 = vst.msk [vmem:[#allocation2 + $0x38] sm:$0xff] %vm1492, %v1458
        %1500 = vst [vmem:[#allocation2 + $0x40] sm:$0xff] %v1459
        %1501 = vst.msk [vmem:[#allocation2 + $0x48] sm:$0xff] %vm1492, %v1460
        %1502 = vst [vmem:[#allocation2 + $0x50] sm:$0xff] %v1461
        %1503 = vst.msk [vmem:[#allocation2 + $0x58] sm:$0xff] %vm1492, %v1462
        %1504 = vst [vmem:[#allocation2 + $0x60] sm:$0xff] %v1463
        %1505 = vst.msk [vmem:[#allocation2 + $0x68] sm:$0xff] %vm1492, %v1464
        %1506 = vst [vmem:[#allocation2 + $0x70] sm:$0xff] %v1465
        %1507 = vst.msk [vmem:[#allocation2 + $0x78] sm:$0xff] %vm1492, %v1466
        %1508 = vst [vmem:[#allocation2 + $0x80] sm:$0xff] %v1467
        %1509 = vst.msk [vmem:[#allocation2 + $0x88] sm:$0xff] %vm1492, %v1468
        %1510 = vst [vmem:[#allocation2 + $0x90] sm:$0xff] %v1469
        %1511 = vst.msk [vmem:[#allocation2 + $0x98] sm:$0xff] %vm1492, %v1470
        %1512 = vst [vmem:[#allocation2 + $0xa0] sm:$0xff] %v1471
        %1513 = vst.msk [vmem:[#allocation2 + $0xa8] sm:$0xff] %vm1492, %v1472
        %1514 = vst [vmem:[#allocation2 + $0xb0] sm:$0xff] %v1473
        %1515 = vst.msk [vmem:[#allocation2 + $0xb8] sm:$0xff] %vm1492, %v1474
        %1516 = vst [vmem:[#allocation2 + $0xc0] sm:$0xff] %v1475
        %1517 = vst.msk [vmem:[#allocation2 + $0xc8] sm:$0xff] %vm1492, %v1476
        %1518 = vst [vmem:[#allocation2 + $0xd0] sm:$0xff] %v1477
        %1519 = vst.msk [vmem:[#allocation2 + $0xd8] sm:$0xff] %vm1492, %v1478
        %1520 = vst [vmem:[#allocation2 + $0xe0] sm:$0xff] %v1479
        %1521 = vst.msk [vmem:[#allocation2 + $0xe8] sm:$0xff] %vm1492, %v1480
        %1522 = vst [vmem:[#allocation2 + $0xf0] sm:$0xff] %v1481
        %1523 = vst.msk [vmem:[#allocation2 + $0xf8] sm:$0xff] %vm1492, %v1482
        %1524 = vst [vmem:[#allocation2 + $0x100] sm:$0xff] %v1483
        %1525 = vst.msk [vmem:[#allocation2 + $0x108] sm:$0xff] %vm1492, %v1484
        %1526 = vst [vmem:[#allocation2 + $0x110] sm:$0xff] %v1485
        %1527 = vst.msk [vmem:[#allocation2 + $0x118] sm:$0xff] %vm1492, %v1486
        %1528 = vst [vmem:[#allocation2 + $0x120] sm:$0xff] %v1487
        %1529 = vst.msk [vmem:[#allocation2 + $0x128] sm:$0xff] %vm1492, %v1488
        %1530 = vst [vmem:[#allocation2 + $0x130] sm:$0xff] %v1489
        %1531 = vst.msk [vmem:[#allocation2 + $0x138] sm:$0xff] %vm1492, %v1490
        %p1532 = scmp.eq.s32.totalorder %s17, 2
        // Predicated region
        $region45: #{tpu_custom_call.1} parent=39 // pred_check
          %p1533 = pneg %p1532
        $region46: #{tpu_custom_call.1} parent=39 // pred_check_branch
          %1535 = sbr.rel (%p1533) target = $region48
        $region47: #{tpu_custom_call.1} parent=39 // pred_region
          %v1536 = vld [vmem:[#allocation2] sm:$0xff]
          %v1537 = vld [vmem:[#allocation2 + $0x8] sm:$0xff]
          %v1538 = vld [vmem:[#allocation2 + $0x10] sm:$0xff]
          %v1539 = vld [vmem:[#allocation2 + $0x18] sm:$0xff]
          %v1540 = vld [vmem:[#allocation2 + $0x20] sm:$0xff]
          %v1541 = vld [vmem:[#allocation2 + $0x28] sm:$0xff]
          %v1542 = vld [vmem:[#allocation2 + $0x30] sm:$0xff]
          %v1543 = vld [vmem:[#allocation2 + $0x38] sm:$0xff]
          %v1544 = vld [vmem:[#allocation2 + $0x40] sm:$0xff]
          %v1545 = vld [vmem:[#allocation2 + $0x48] sm:$0xff]
          %v1546 = vld [vmem:[#allocation2 + $0x50] sm:$0xff]
          %v1547 = vld [vmem:[#allocation2 + $0x58] sm:$0xff]
          %v1548 = vld [vmem:[#allocation2 + $0x60] sm:$0xff]
          %v1549 = vld [vmem:[#allocation2 + $0x68] sm:$0xff]
          %v1550 = vld [vmem:[#allocation2 + $0x70] sm:$0xff]
          %v1551 = vld [vmem:[#allocation2 + $0x78] sm:$0xff]
          %v1552 = vld [vmem:[#allocation2 + $0x80] sm:$0xff]
          %v1553 = vld [vmem:[#allocation2 + $0x88] sm:$0xff]
          %v1554 = vld [vmem:[#allocation2 + $0x90] sm:$0xff]
          %v1555 = vld [vmem:[#allocation2 + $0x98] sm:$0xff]
          %v1556 = vld [vmem:[#allocation2 + $0xa0] sm:$0xff]
          %v1557 = vld [vmem:[#allocation2 + $0xa8] sm:$0xff]
          %v1558 = vld [vmem:[#allocation2 + $0xb0] sm:$0xff]
          %v1559 = vld [vmem:[#allocation2 + $0xb8] sm:$0xff]
          %v1560 = vld [vmem:[#allocation2 + $0xc0] sm:$0xff]
          %v1561 = vld [vmem:[#allocation2 + $0xc8] sm:$0xff]
          %v1562 = vld [vmem:[#allocation2 + $0xd0] sm:$0xff]
          %v1563 = vld [vmem:[#allocation2 + $0xd8] sm:$0xff]
          %v1564 = vld [vmem:[#allocation2 + $0xe0] sm:$0xff]
          %v1565 = vld [vmem:[#allocation2 + $0xe8] sm:$0xff]
          %v1566 = vld [vmem:[#allocation2 + $0xf0] sm:$0xff]
          %v1567 = vld [vmem:[#allocation2 + $0xf8] sm:$0xff]
          %v1568 = vld [vmem:[#allocation2 + $0x100] sm:$0xff]
          %v1569 = vld [vmem:[#allocation2 + $0x108] sm:$0xff]
          %v1570 = vld [vmem:[#allocation2 + $0x110] sm:$0xff]
          %v1571 = vld [vmem:[#allocation2 + $0x118] sm:$0xff]
          %v1572 = vld [vmem:[#allocation2 + $0x120] sm:$0xff]
          %v1573 = vld [vmem:[#allocation2 + $0x128] sm:$0xff]
          %v1574 = vld [vmem:[#allocation2 + $0x130] sm:$0xff]
          %v1575 = vld [vmem:[#allocation2 + $0x138] sm:$0xff]
          %v1576 = vsel %vm1492, %v1537, 0.0
          %v1577 = vadd.f32 %v1536, %v1576
          %1578 = vadd.xlane.f32.xlu0 %v1577
          %v1579 = vpop.xlane.xlu0 %1578
          %v1580 = vsel %vm1492, %v1539, 0.0
          %v1581 = vadd.f32 %v1538, %v1580
          %1582 = vadd.xlane.f32.xlu0 %v1581
          %v1583 = vpop.xlane.xlu0 %1582
          %v1584 = vsel %vm1492, %v1541, 0.0
          %v1585 = vadd.f32 %v1540, %v1584
          %1586 = vadd.xlane.f32.xlu0 %v1585
          %v1587 = vpop.xlane.xlu0 %1586
          %v1588 = vsel %vm1492, %v1543, 0.0
          %v1589 = vadd.f32 %v1542, %v1588
          %1590 = vadd.xlane.f32.xlu0 %v1589
          %v1591 = vpop.xlane.xlu0 %1590
          %v1592 = vsel %vm1492, %v1545, 0.0
          %v1593 = vadd.f32 %v1544, %v1592
          %1594 = vadd.xlane.f32.xlu0 %v1593
          %v1595 = vpop.xlane.xlu0 %1594
          %v1596 = vsel %vm1492, %v1547, 0.0
          %v1597 = vadd.f32 %v1546, %v1596
          %1598 = vadd.xlane.f32.xlu0 %v1597
          %v1599 = vpop.xlane.xlu0 %1598
          %v1600 = vsel %vm1492, %v1549, 0.0
          %v1601 = vadd.f32 %v1548, %v1600
          %1602 = vadd.xlane.f32.xlu0 %v1601
          %v1603 = vpop.xlane.xlu0 %1602
          %v1604 = vsel %vm1492, %v1551, 0.0
          %v1605 = vadd.f32 %v1550, %v1604
          %1606 = vadd.xlane.f32.xlu0 %v1605
          %v1607 = vpop.xlane.xlu0 %1606
          %v1608 = vsel %vm1492, %v1553, 0.0
          %v1609 = vadd.f32 %v1552, %v1608
          %1610 = vadd.xlane.f32.xlu0 %v1609
          %v1611 = vpop.xlane.xlu0 %1610
          %v1612 = vsel %vm1492, %v1555, 0.0
          %v1613 = vadd.f32 %v1554, %v1612
          %1614 = vadd.xlane.f32.xlu0 %v1613
          %v1615 = vpop.xlane.xlu0 %1614
          %v1616 = vsel %vm1492, %v1557, 0.0
          %v1617 = vadd.f32 %v1556, %v1616
          %1618 = vadd.xlane.f32.xlu0 %v1617
          %v1619 = vpop.xlane.xlu0 %1618
          %v1620 = vsel %vm1492, %v1559, 0.0
          %v1621 = vadd.f32 %v1558, %v1620
          %1622 = vadd.xlane.f32.xlu0 %v1621
          %v1623 = vpop.xlane.xlu0 %1622
          %v1624 = vsel %vm1492, %v1561, 0.0
          %v1625 = vadd.f32 %v1560, %v1624
          %1626 = vadd.xlane.f32.xlu0 %v1625
          %v1627 = vpop.xlane.xlu0 %1626
          %v1628 = vsel %vm1492, %v1563, 0.0
          %v1629 = vadd.f32 %v1562, %v1628
          %1630 = vadd.xlane.f32.xlu0 %v1629
          %v1631 = vpop.xlane.xlu0 %1630
          %v1632 = vsel %vm1492, %v1565, 0.0
          %v1633 = vadd.f32 %v1564, %v1632
          %1634 = vadd.xlane.f32.xlu0 %v1633
          %v1635 = vpop.xlane.xlu0 %1634
          %v1636 = vsel %vm1492, %v1567, 0.0
          %v1637 = vadd.f32 %v1566, %v1636
          %1638 = vadd.xlane.f32.xlu0 %v1637
          %v1639 = vpop.xlane.xlu0 %1638
          %v1640 = vsel %vm1492, %v1569, 0.0
          %v1641 = vadd.f32 %v1568, %v1640
          %1642 = vadd.xlane.f32.xlu0 %v1641
          %v1643 = vpop.xlane.xlu0 %1642
          %v1644 = vsel %vm1492, %v1571, 0.0
          %v1645 = vadd.f32 %v1570, %v1644
          %1646 = vadd.xlane.f32.xlu0 %v1645
          %v1647 = vpop.xlane.xlu0 %1646
          %v1648 = vsel %vm1492, %v1573, 0.0
          %v1649 = vadd.f32 %v1572, %v1648
          %1650 = vadd.xlane.f32.xlu0 %v1649
          %v1651 = vpop.xlane.xlu0 %1650
          %v1652 = vsel %vm1492, %v1575, 0.0
          %v1653 = vadd.f32 %v1574, %v1652
          %1654 = vadd.xlane.f32.xlu0 %v1653
          %v1655 = vpop.xlane.xlu0 %1654
          %v1656 = vmul.f32 %v1536, %v1536
          %v1657 = vmul.f32 %v1537, %v1537
          %v1658 = vmul.f32 %v1538, %v1538
          %v1659 = vmul.f32 %v1539, %v1539
          %v1660 = vmul.f32 %v1540, %v1540
          %v1661 = vmul.f32 %v1541, %v1541
          %v1662 = vmul.f32 %v1542, %v1542
          %v1663 = vmul.f32 %v1543, %v1543
          %v1664 = vmul.f32 %v1544, %v1544
          %v1665 = vmul.f32 %v1545, %v1545
          %v1666 = vmul.f32 %v1546, %v1546
          %v1667 = vmul.f32 %v1547, %v1547
          %v1668 = vmul.f32 %v1548, %v1548
          %v1669 = vmul.f32 %v1549, %v1549
          %v1670 = vmul.f32 %v1550, %v1550
          %v1671 = vmul.f32 %v1551, %v1551
          %v1672 = vmul.f32 %v1552, %v1552
          %v1673 = vmul.f32 %v1553, %v1553
          %v1674 = vmul.f32 %v1554, %v1554
          %v1675 = vmul.f32 %v1555, %v1555
          %v1676 = vmul.f32 %v1556, %v1556
          %v1677 = vmul.f32 %v1557, %v1557
          %v1678 = vmul.f32 %v1558, %v1558
          %v1679 = vmul.f32 %v1559, %v1559
          %v1680 = vmul.f32 %v1560, %v1560
          %v1681 = vmul.f32 %v1561, %v1561
          %v1682 = vmul.f32 %v1562, %v1562
          %v1683 = vmul.f32 %v1563, %v1563
          %v1684 = vmul.f32 %v1564, %v1564
          %v1685 = vmul.f32 %v1565, %v1565
          %v1686 = vmul.f32 %v1566, %v1566
          %v1687 = vmul.f32 %v1567, %v1567
          %v1688 = vmul.f32 %v1568, %v1568
          %v1689 = vmul.f32 %v1569, %v1569
          %v1690 = vmul.f32 %v1570, %v1570
          %v1691 = vmul.f32 %v1571, %v1571
          %v1692 = vmul.f32 %v1572, %v1572
          %v1693 = vmul.f32 %v1573, %v1573
          %v1694 = vmul.f32 %v1574, %v1574
          %v1695 = vmul.f32 %v1575, %v1575
          %v1696 = vsel %vm1492, %v1657, 0.0
          %v1697 = vadd.f32 %v1656, %v1696
          %1698 = vadd.xlane.f32.xlu0 %v1697
          %v1699 = vpop.xlane.xlu0 %1698
          %v1700 = vsel %vm1492, %v1659, 0.0
          %v1701 = vadd.f32 %v1658, %v1700
          %1702 = vadd.xlane.f32.xlu0 %v1701
          %v1703 = vpop.xlane.xlu0 %1702
          %v1704 = vsel %vm1492, %v1661, 0.0
          %v1705 = vadd.f32 %v1660, %v1704
          %1706 = vadd.xlane.f32.xlu0 %v1705
          %v1707 = vpop.xlane.xlu0 %1706
          %v1708 = vsel %vm1492, %v1663, 0.0
          %v1709 = vadd.f32 %v1662, %v1708
          %1710 = vadd.xlane.f32.xlu0 %v1709
          %v1711 = vpop.xlane.xlu0 %1710
          %v1712 = vsel %vm1492, %v1665, 0.0
          %v1713 = vadd.f32 %v1664, %v1712
          %1714 = vadd.xlane.f32.xlu0 %v1713
          %v1715 = vpop.xlane.xlu0 %1714
          %v1716 = vsel %vm1492, %v1667, 0.0
          %v1717 = vadd.f32 %v1666, %v1716
          %1718 = vadd.xlane.f32.xlu0 %v1717
          %v1719 = vpop.xlane.xlu0 %1718
          %v1720 = vsel %vm1492, %v1669, 0.0
          %v1721 = vadd.f32 %v1668, %v1720
          %1722 = vadd.xlane.f32.xlu0 %v1721
          %v1723 = vpop.xlane.xlu0 %1722
          %v1724 = vsel %vm1492, %v1671, 0.0
          %v1725 = vadd.f32 %v1670, %v1724
          %1726 = vadd.xlane.f32.xlu0 %v1725
          %v1727 = vpop.xlane.xlu0 %1726
          %v1728 = vsel %vm1492, %v1673, 0.0
          %v1729 = vadd.f32 %v1672, %v1728
          %1730 = vadd.xlane.f32.xlu0 %v1729
          %v1731 = vpop.xlane.xlu0 %1730
          %v1732 = vsel %vm1492, %v1675, 0.0
          %v1733 = vadd.f32 %v1674, %v1732
          %1734 = vadd.xlane.f32.xlu0 %v1733
          %v1735 = vpop.xlane.xlu0 %1734
          %v1736 = vsel %vm1492, %v1677, 0.0
          %v1737 = vadd.f32 %v1676, %v1736
          %1738 = vadd.xlane.f32.xlu0 %v1737
          %v1739 = vpop.xlane.xlu0 %1738
          %v1740 = vsel %vm1492, %v1679, 0.0
          %v1741 = vadd.f32 %v1678, %v1740
          %1742 = vadd.xlane.f32.xlu0 %v1741
          %v1743 = vpop.xlane.xlu0 %1742
          %v1744 = vsel %vm1492, %v1681, 0.0
          %v1745 = vadd.f32 %v1680, %v1744
          %1746 = vadd.xlane.f32.xlu0 %v1745
          %v1747 = vpop.xlane.xlu0 %1746
          %v1748 = vsel %vm1492, %v1683, 0.0
          %v1749 = vadd.f32 %v1682, %v1748
          %1750 = vadd.xlane.f32.xlu0 %v1749
          %v1751 = vpop.xlane.xlu0 %1750
          %v1752 = vsel %vm1492, %v1685, 0.0
          %v1753 = vadd.f32 %v1684, %v1752
          %1754 = vadd.xlane.f32.xlu0 %v1753
          %v1755 = vpop.xlane.xlu0 %1754
          %v1756 = vsel %vm1492, %v1687, 0.0
          %v1757 = vadd.f32 %v1686, %v1756
          %1758 = vadd.xlane.f32.xlu0 %v1757
          %v1759 = vpop.xlane.xlu0 %1758
          %v1760 = vsel %vm1492, %v1689, 0.0
          %v1761 = vadd.f32 %v1688, %v1760
          %1762 = vadd.xlane.f32.xlu0 %v1761
          %v1763 = vpop.xlane.xlu0 %1762
          %v1764 = vsel %vm1492, %v1691, 0.0
          %v1765 = vadd.f32 %v1690, %v1764
          %1766 = vadd.xlane.f32.xlu0 %v1765
          %v1767 = vpop.xlane.xlu0 %1766
          %v1768 = vsel %vm1492, %v1693, 0.0
          %v1769 = vadd.f32 %v1692, %v1768
          %1770 = vadd.xlane.f32.xlu0 %v1769
          %v1771 = vpop.xlane.xlu0 %1770
          %v1772 = vsel %vm1492, %v1695, 0.0
          %v1773 = vadd.f32 %v1694, %v1772
          %1774 = vadd.xlane.f32.xlu0 %v1773
          %v1775 = vpop.xlane.xlu0 %1774
          %v1776 = vmul.f32 %v1579, 0.0051020407
          %v1777 = vmul.f32 %v1583, 0.0051020407
          %v1778 = vmul.f32 %v1587, 0.0051020407
          %v1779 = vmul.f32 %v1591, 0.0051020407
          %v1780 = vmul.f32 %v1595, 0.0051020407
          %v1781 = vmul.f32 %v1599, 0.0051020407
          %v1782 = vmul.f32 %v1603, 0.0051020407
          %v1783 = vmul.f32 %v1607, 0.0051020407
          %v1784 = vmul.f32 %v1611, 0.0051020407
          %v1785 = vmul.f32 %v1615, 0.0051020407
          %v1786 = vmul.f32 %v1619, 0.0051020407
          %v1787 = vmul.f32 %v1623, 0.0051020407
          %v1788 = vmul.f32 %v1627, 0.0051020407
          %v1789 = vmul.f32 %v1631, 0.0051020407
          %v1790 = vmul.f32 %v1635, 0.0051020407
          %v1791 = vmul.f32 %v1639, 0.0051020407
          %v1792 = vmul.f32 %v1643, 0.0051020407
          %v1793 = vmul.f32 %v1647, 0.0051020407
          %v1794 = vmul.f32 %v1651, 0.0051020407
          %v1795 = vmul.f32 %v1655, 0.0051020407
          %v1796 = vmul.f32 %v1699, 0.0051020407
          %v1797 = vmul.f32 %v1703, 0.0051020407
          %v1798 = vmul.f32 %v1707, 0.0051020407
          %v1799 = vmul.f32 %v1711, 0.0051020407
          %v1800 = vmul.f32 %v1715, 0.0051020407
          %v1801 = vmul.f32 %v1719, 0.0051020407
          %v1802 = vmul.f32 %v1723, 0.0051020407
          %v1803 = vmul.f32 %v1727, 0.0051020407
          %v1804 = vmul.f32 %v1731, 0.0051020407
          %v1805 = vmul.f32 %v1735, 0.0051020407
          %v1806 = vmul.f32 %v1739, 0.0051020407
          %v1807 = vmul.f32 %v1743, 0.0051020407
          %v1808 = vmul.f32 %v1747, 0.0051020407
          %v1809 = vmul.f32 %v1751, 0.0051020407
          %v1810 = vmul.f32 %v1755, 0.0051020407
          %v1811 = vmul.f32 %v1759, 0.0051020407
          %v1812 = vmul.f32 %v1763, 0.0051020407
          %v1813 = vmul.f32 %v1767, 0.0051020407
          %v1814 = vmul.f32 %v1771, 0.0051020407
          %v1815 = vmul.f32 %v1775, 0.0051020407
          %v1816 = vmul.f32 %v1776, %v1776
          %v1817 = vmul.f32 %v1777, %v1777
          %v1818 = vmul.f32 %v1778, %v1778
          %v1819 = vmul.f32 %v1779, %v1779
          %v1820 = vmul.f32 %v1780, %v1780
          %v1821 = vmul.f32 %v1781, %v1781
          %v1822 = vmul.f32 %v1782, %v1782
          %v1823 = vmul.f32 %v1783, %v1783
          %v1824 = vmul.f32 %v1784, %v1784
          %v1825 = vmul.f32 %v1785, %v1785
          %v1826 = vmul.f32 %v1786, %v1786
          %v1827 = vmul.f32 %v1787, %v1787
          %v1828 = vmul.f32 %v1788, %v1788
          %v1829 = vmul.f32 %v1789, %v1789
          %v1830 = vmul.f32 %v1790, %v1790
          %v1831 = vmul.f32 %v1791, %v1791
          %v1832 = vmul.f32 %v1792, %v1792
          %v1833 = vmul.f32 %v1793, %v1793
          %v1834 = vmul.f32 %v1794, %v1794
          %v1835 = vmul.f32 %v1795, %v1795
          %v1836 = vsub.f32 %v1796, %v1816
          %v1837 = vsub.f32 %v1797, %v1817
          %v1838 = vsub.f32 %v1798, %v1818
          %v1839 = vsub.f32 %v1799, %v1819
          %v1840 = vsub.f32 %v1800, %v1820
          %v1841 = vsub.f32 %v1801, %v1821
          %v1842 = vsub.f32 %v1802, %v1822
          %v1843 = vsub.f32 %v1803, %v1823
          %v1844 = vsub.f32 %v1804, %v1824
          %v1845 = vsub.f32 %v1805, %v1825
          %v1846 = vsub.f32 %v1806, %v1826
          %v1847 = vsub.f32 %v1807, %v1827
          %v1848 = vsub.f32 %v1808, %v1828
          %v1849 = vsub.f32 %v1809, %v1829
          %v1850 = vsub.f32 %v1810, %v1830
          %v1851 = vsub.f32 %v1811, %v1831
          %v1852 = vsub.f32 %v1812, %v1832
          %v1853 = vsub.f32 %v1813, %v1833
          %v1854 = vsub.f32 %v1814, %v1834
          %v1855 = vsub.f32 %v1815, %v1835
          %v1856 = vmax.f32 %v1836, 0.0
          %v1857 = vmax.f32 %v1837, 0.0
          %v1858 = vmax.f32 %v1838, 0.0
          %v1859 = vmax.f32 %v1839, 0.0
          %v1860 = vmax.f32 %v1840, 0.0
          %v1861 = vmax.f32 %v1841, 0.0
          %v1862 = vmax.f32 %v1842, 0.0
          %v1863 = vmax.f32 %v1843, 0.0
          %v1864 = vmax.f32 %v1844, 0.0
          %v1865 = vmax.f32 %v1845, 0.0
          %v1866 = vmax.f32 %v1846, 0.0
          %v1867 = vmax.f32 %v1847, 0.0
          %v1868 = vmax.f32 %v1848, 0.0
          %v1869 = vmax.f32 %v1849, 0.0
          %v1870 = vmax.f32 %v1850, 0.0
          %v1871 = vmax.f32 %v1851, 0.0
          %v1872 = vmax.f32 %v1852, 0.0
          %v1873 = vmax.f32 %v1853, 0.0
          %v1874 = vmax.f32 %v1854, 0.0
          %v1875 = vmax.f32 %v1855, 0.0
          %v1876 = vld [vmem:[%s3] sm:$0xff]
          %v1877 = vld [vmem:[%s3 + $0x8] sm:$0xff]
          %v1878 = vld [vmem:[%s3 + $0x10] sm:$0xff]
          %v1879 = vld [vmem:[%s3 + $0x18] sm:$0xff]
          %v1880 = vld [vmem:[%s3 + $0x20] sm:$0xff]
          %v1881 = vld [vmem:[%s3 + $0x28] sm:$0xff]
          %v1882 = vld [vmem:[%s3 + $0x30] sm:$0xff]
          %v1883 = vld [vmem:[%s3 + $0x38] sm:$0xff]
          %v1884 = vld [vmem:[%s3 + $0x40] sm:$0xff]
          %v1885 = vld [vmem:[%s3 + $0x48] sm:$0xff]
          %v1886 = vld [vmem:[%s3 + $0x50] sm:$0xff]
          %v1887 = vld [vmem:[%s3 + $0x58] sm:$0xff]
          %v1888 = vld [vmem:[%s3 + $0x60] sm:$0xff]
          %v1889 = vld [vmem:[%s3 + $0x68] sm:$0xff]
          %v1890 = vld [vmem:[%s3 + $0x70] sm:$0xff]
          %v1891 = vld [vmem:[%s3 + $0x78] sm:$0xff]
          %v1892 = vld [vmem:[%s3 + $0x80] sm:$0xff]
          %v1893 = vld [vmem:[%s3 + $0x88] sm:$0xff]
          %v1894 = vld [vmem:[%s3 + $0x90] sm:$0xff]
          %v1895 = vld [vmem:[%s3 + $0x98] sm:$0xff]
          %v1896 = vadd.f32 %v1856, 1e-05
          %v1897 = vadd.f32 %v1857, 1e-05
          %v1898 = vadd.f32 %v1858, 1e-05
          %v1899 = vadd.f32 %v1859, 1e-05
          %v1900 = vadd.f32 %v1860, 1e-05
          %v1901 = vadd.f32 %v1861, 1e-05
          %v1902 = vadd.f32 %v1862, 1e-05
          %v1903 = vadd.f32 %v1863, 1e-05
          %v1904 = vadd.f32 %v1864, 1e-05
          %v1905 = vadd.f32 %v1865, 1e-05
          %v1906 = vadd.f32 %v1866, 1e-05
          %v1907 = vadd.f32 %v1867, 1e-05
          %v1908 = vadd.f32 %v1868, 1e-05
          %v1909 = vadd.f32 %v1869, 1e-05
          %v1910 = vadd.f32 %v1870, 1e-05
          %v1911 = vadd.f32 %v1871, 1e-05
          %v1912 = vadd.f32 %v1872, 1e-05
          %v1913 = vadd.f32 %v1873, 1e-05
          %v1914 = vadd.f32 %v1874, 1e-05
          %v1915 = vadd.f32 %v1875, 1e-05
          %v1916 = vrsqrt.pop %v1896
          %v1917 = vrsqrt.pop %v1897
          %v1918 = vrsqrt.pop %v1898
          %v1919 = vrsqrt.pop %v1899
          %v1920 = vrsqrt.pop %v1900
          %v1921 = vrsqrt.pop %v1901
          %v1922 = vrsqrt.pop %v1902
          %v1923 = vrsqrt.pop %v1903
          %v1924 = vrsqrt.pop %v1904
          %v1925 = vrsqrt.pop %v1905
          %v1926 = vrsqrt.pop %v1906
          %v1927 = vrsqrt.pop %v1907
          %v1928 = vrsqrt.pop %v1908
          %v1929 = vrsqrt.pop %v1909
          %v1930 = vrsqrt.pop %v1910
          %v1931 = vrsqrt.pop %v1911
          %v1932 = vrsqrt.pop %v1912
          %v1933 = vrsqrt.pop %v1913
          %v1934 = vrsqrt.pop %v1914
          %v1935 = vrsqrt.pop %v1915
          %v1936 = vmul.f32 %v1876, %v1916
          %v1937 = vmul.f32 %v1877, %v1917
          %v1938 = vmul.f32 %v1878, %v1918
          %v1939 = vmul.f32 %v1879, %v1919
          %v1940 = vmul.f32 %v1880, %v1920
          %v1941 = vmul.f32 %v1881, %v1921
          %v1942 = vmul.f32 %v1882, %v1922
          %v1943 = vmul.f32 %v1883, %v1923
          %v1944 = vmul.f32 %v1884, %v1924
          %v1945 = vmul.f32 %v1885, %v1925
          %v1946 = vmul.f32 %v1886, %v1926
          %v1947 = vmul.f32 %v1887, %v1927
          %v1948 = vmul.f32 %v1888, %v1928
          %v1949 = vmul.f32 %v1889, %v1929
          %v1950 = vmul.f32 %v1890, %v1930
          %v1951 = vmul.f32 %v1891, %v1931
          %v1952 = vmul.f32 %v1892, %v1932
          %v1953 = vmul.f32 %v1893, %v1933
          %v1954 = vmul.f32 %v1894, %v1934
          %v1955 = vmul.f32 %v1895, %v1935
          %v1956 = vld [vmem:[%s4] sm:$0xff]
          %v1957 = vld [vmem:[%s4 + $0x8] sm:$0xff]
          %v1958 = vld [vmem:[%s4 + $0x10] sm:$0xff]
          %v1959 = vld [vmem:[%s4 + $0x18] sm:$0xff]
          %v1960 = vld [vmem:[%s4 + $0x20] sm:$0xff]
          %v1961 = vld [vmem:[%s4 + $0x28] sm:$0xff]
          %v1962 = vld [vmem:[%s4 + $0x30] sm:$0xff]
          %v1963 = vld [vmem:[%s4 + $0x38] sm:$0xff]
          %v1964 = vld [vmem:[%s4 + $0x40] sm:$0xff]
          %v1965 = vld [vmem:[%s4 + $0x48] sm:$0xff]
          %v1966 = vld [vmem:[%s4 + $0x50] sm:$0xff]
          %v1967 = vld [vmem:[%s4 + $0x58] sm:$0xff]
          %v1968 = vld [vmem:[%s4 + $0x60] sm:$0xff]
          %v1969 = vld [vmem:[%s4 + $0x68] sm:$0xff]
          %v1970 = vld [vmem:[%s4 + $0x70] sm:$0xff]
          %v1971 = vld [vmem:[%s4 + $0x78] sm:$0xff]
          %v1972 = vld [vmem:[%s4 + $0x80] sm:$0xff]
          %v1973 = vld [vmem:[%s4 + $0x88] sm:$0xff]
          %v1974 = vld [vmem:[%s4 + $0x90] sm:$0xff]
          %v1975 = vld [vmem:[%s4 + $0x98] sm:$0xff]
          %v1976 = vmul.f32 %v1776, %v1936
          %v1977 = vmul.f32 %v1777, %v1937
          %v1978 = vmul.f32 %v1778, %v1938
          %v1979 = vmul.f32 %v1779, %v1939
          %v1980 = vmul.f32 %v1780, %v1940
          %v1981 = vmul.f32 %v1781, %v1941
          %v1982 = vmul.f32 %v1782, %v1942
          %v1983 = vmul.f32 %v1783, %v1943
          %v1984 = vmul.f32 %v1784, %v1944
          %v1985 = vmul.f32 %v1785, %v1945
          %v1986 = vmul.f32 %v1786, %v1946
          %v1987 = vmul.f32 %v1787, %v1947
          %v1988 = vmul.f32 %v1788, %v1948
          %v1989 = vmul.f32 %v1789, %v1949
          %v1990 = vmul.f32 %v1790, %v1950
          %v1991 = vmul.f32 %v1791, %v1951
          %v1992 = vmul.f32 %v1792, %v1952
          %v1993 = vmul.f32 %v1793, %v1953
          %v1994 = vmul.f32 %v1794, %v1954
          %v1995 = vmul.f32 %v1795, %v1955
          %v1996 = vsub.f32 %v1956, %v1976
          %v1997 = vsub.f32 %v1957, %v1977
          %v1998 = vsub.f32 %v1958, %v1978
          %v1999 = vsub.f32 %v1959, %v1979
          %v2000 = vsub.f32 %v1960, %v1980
          %v2001 = vsub.f32 %v1961, %v1981
          %v2002 = vsub.f32 %v1962, %v1982
          %v2003 = vsub.f32 %v1963, %v1983
          %v2004 = vsub.f32 %v1964, %v1984
          %v2005 = vsub.f32 %v1965, %v1985
          %v2006 = vsub.f32 %v1966, %v1986
          %v2007 = vsub.f32 %v1967, %v1987
          %v2008 = vsub.f32 %v1968, %v1988
          %v2009 = vsub.f32 %v1969, %v1989
          %v2010 = vsub.f32 %v1970, %v1990
          %v2011 = vsub.f32 %v1971, %v1991
          %v2012 = vsub.f32 %v1972, %v1992
          %v2013 = vsub.f32 %v1973, %v1993
          %v2014 = vsub.f32 %v1974, %v1994
          %v2015 = vsub.f32 %v1975, %v1995
          %2017 = vset.pattern.permute.xlu0 0
          %2018 = vperm.xlu0 %2017, %v1936
          %v2019 = vpop.permute.xlu0 %2018
          %2022 = vset.pattern.permute.xlu0 0
          %2023 = vperm.xlu0 %2022, %v1937
          %v2024 = vpop.permute.xlu0 %2023
          %2027 = vset.pattern.permute.xlu0 0
          %2028 = vperm.xlu0 %2027, %v1938
          %v2029 = vpop.permute.xlu0 %2028
          %2032 = vset.pattern.permute.xlu0 0
          %2033 = vperm.xlu0 %2032, %v1939
          %v2034 = vpop.permute.xlu0 %2033
          %2037 = vset.pattern.permute.xlu0 0
          %2038 = vperm.xlu0 %2037, %v1940
          %v2039 = vpop.permute.xlu0 %2038
          %2042 = vset.pattern.permute.xlu0 0
          %2043 = vperm.xlu0 %2042, %v1941
          %v2044 = vpop.permute.xlu0 %2043
          %2047 = vset.pattern.permute.xlu0 0
          %2048 = vperm.xlu0 %2047, %v1942
          %v2049 = vpop.permute.xlu0 %2048
          %2052 = vset.pattern.permute.xlu0 0
          %2053 = vperm.xlu0 %2052, %v1943
          %v2054 = vpop.permute.xlu0 %2053
          %2057 = vset.pattern.permute.xlu0 0
          %2058 = vperm.xlu0 %2057, %v1944
          %v2059 = vpop.permute.xlu0 %2058
          %2062 = vset.pattern.permute.xlu0 0
          %2063 = vperm.xlu0 %2062, %v1945
          %v2064 = vpop.permute.xlu0 %2063
          %2067 = vset.pattern.permute.xlu0 0
          %2068 = vperm.xlu0 %2067, %v1946
          %v2069 = vpop.permute.xlu0 %2068
          %2072 = vset.pattern.permute.xlu0 0
          %2073 = vperm.xlu0 %2072, %v1947
          %v2074 = vpop.permute.xlu0 %2073
          %2077 = vset.pattern.permute.xlu0 0
          %2078 = vperm.xlu0 %2077, %v1948
          %v2079 = vpop.permute.xlu0 %2078
          %2082 = vset.pattern.permute.xlu0 0
          %2083 = vperm.xlu0 %2082, %v1949
          %v2084 = vpop.permute.xlu0 %2083
          %2087 = vset.pattern.permute.xlu0 0
          %2088 = vperm.xlu0 %2087, %v1950
          %v2089 = vpop.permute.xlu0 %2088
          %2092 = vset.pattern.permute.xlu0 0
          %2093 = vperm.xlu0 %2092, %v1951
          %v2094 = vpop.permute.xlu0 %2093
          %2097 = vset.pattern.permute.xlu0 0
          %2098 = vperm.xlu0 %2097, %v1952
          %v2099 = vpop.permute.xlu0 %2098
          %2102 = vset.pattern.permute.xlu0 0
          %2103 = vperm.xlu0 %2102, %v1953
          %v2104 = vpop.permute.xlu0 %2103
          %2107 = vset.pattern.permute.xlu0 0
          %2108 = vperm.xlu0 %2107, %v1954
          %v2109 = vpop.permute.xlu0 %2108
          %2112 = vset.pattern.permute.xlu0 0
          %2113 = vperm.xlu0 %2112, %v1955
          %v2114 = vpop.permute.xlu0 %2113
          %v2116 = vmul.f32 %v1536, %v2019
          %v2117 = vmul.f32 %v1537, %v2019
          %v2118 = vmul.f32 %v1538, %v2024
          %v2119 = vmul.f32 %v1539, %v2024
          %v2120 = vmul.f32 %v1540, %v2029
          %v2121 = vmul.f32 %v1541, %v2029
          %v2122 = vmul.f32 %v1542, %v2034
          %v2123 = vmul.f32 %v1543, %v2034
          %v2124 = vmul.f32 %v1544, %v2039
          %v2125 = vmul.f32 %v1545, %v2039
          %v2126 = vmul.f32 %v1546, %v2044
          %v2127 = vmul.f32 %v1547, %v2044
          %v2128 = vmul.f32 %v1548, %v2049
          %v2129 = vmul.f32 %v1549, %v2049
          %v2130 = vmul.f32 %v1550, %v2054
          %v2131 = vmul.f32 %v1551, %v2054
          %v2132 = vmul.f32 %v1552, %v2059
          %v2133 = vmul.f32 %v1553, %v2059
          %v2134 = vmul.f32 %v1554, %v2064
          %v2135 = vmul.f32 %v1555, %v2064
          %v2136 = vmul.f32 %v1556, %v2069
          %v2137 = vmul.f32 %v1557, %v2069
          %v2138 = vmul.f32 %v1558, %v2074
          %v2139 = vmul.f32 %v1559, %v2074
          %v2140 = vmul.f32 %v1560, %v2079
          %v2141 = vmul.f32 %v1561, %v2079
          %v2142 = vmul.f32 %v1562, %v2084
          %v2143 = vmul.f32 %v1563, %v2084
          %v2144 = vmul.f32 %v1564, %v2089
          %v2145 = vmul.f32 %v1565, %v2089
          %v2146 = vmul.f32 %v1566, %v2094
          %v2147 = vmul.f32 %v1567, %v2094
          %v2148 = vmul.f32 %v1568, %v2099
          %v2149 = vmul.f32 %v1569, %v2099
          %v2150 = vmul.f32 %v1570, %v2104
          %v2151 = vmul.f32 %v1571, %v2104
          %v2152 = vmul.f32 %v1572, %v2109
          %v2153 = vmul.f32 %v1573, %v2109
          %v2154 = vmul.f32 %v1574, %v2114
          %v2155 = vmul.f32 %v1575, %v2114
          %2157 = vset.pattern.permute.xlu0 0
          %2158 = vperm.xlu0 %2157, %v1996
          %v2159 = vpop.permute.xlu0 %2158
          %2162 = vset.pattern.permute.xlu0 0
          %2163 = vperm.xlu0 %2162, %v1997
          %v2164 = vpop.permute.xlu0 %2163
          %2167 = vset.pattern.permute.xlu0 0
          %2168 = vperm.xlu0 %2167, %v1998
          %v2169 = vpop.permute.xlu0 %2168
          %2172 = vset.pattern.permute.xlu0 0
          %2173 = vperm.xlu0 %2172, %v1999
          %v2174 = vpop.permute.xlu0 %2173
          %2177 = vset.pattern.permute.xlu0 0
          %2178 = vperm.xlu0 %2177, %v2000
          %v2179 = vpop.permute.xlu0 %2178
          %2182 = vset.pattern.permute.xlu0 0
          %2183 = vperm.xlu0 %2182, %v2001
          %v2184 = vpop.permute.xlu0 %2183
          %2187 = vset.pattern.permute.xlu0 0
          %2188 = vperm.xlu0 %2187, %v2002
          %v2189 = vpop.permute.xlu0 %2188
          %2192 = vset.pattern.permute.xlu0 0
          %2193 = vperm.xlu0 %2192, %v2003
          %v2194 = vpop.permute.xlu0 %2193
          %2197 = vset.pattern.permute.xlu0 0
          %2198 = vperm.xlu0 %2197, %v2004
          %v2199 = vpop.permute.xlu0 %2198
          %2202 = vset.pattern.permute.xlu0 0
          %2203 = vperm.xlu0 %2202, %v2005
          %v2204 = vpop.permute.xlu0 %2203
          %2207 = vset.pattern.permute.xlu0 0
          %2208 = vperm.xlu0 %2207, %v2006
          %v2209 = vpop.permute.xlu0 %2208
          %2212 = vset.pattern.permute.xlu0 0
          %2213 = vperm.xlu0 %2212, %v2007
          %v2214 = vpop.permute.xlu0 %2213
          %2217 = vset.pattern.permute.xlu0 0
          %2218 = vperm.xlu0 %2217, %v2008
          %v2219 = vpop.permute.xlu0 %2218
          %2222 = vset.pattern.permute.xlu0 0
          %2223 = vperm.xlu0 %2222, %v2009
          %v2224 = vpop.permute.xlu0 %2223
          %2227 = vset.pattern.permute.xlu0 0
          %2228 = vperm.xlu0 %2227, %v2010
          %v2229 = vpop.permute.xlu0 %2228
          %2232 = vset.pattern.permute.xlu0 0
          %2233 = vperm.xlu0 %2232, %v2011
          %v2234 = vpop.permute.xlu0 %2233
          %2237 = vset.pattern.permute.xlu0 0
          %2238 = vperm.xlu0 %2237, %v2012
          %v2239 = vpop.permute.xlu0 %2238
          %2242 = vset.pattern.permute.xlu0 0
          %2243 = vperm.xlu0 %2242, %v2013
          %v2244 = vpop.permute.xlu0 %2243
          %2247 = vset.pattern.permute.xlu0 0
          %2248 = vperm.xlu0 %2247, %v2014
          %v2249 = vpop.permute.xlu0 %2248
          %2252 = vset.pattern.permute.xlu0 0
          %2253 = vperm.xlu0 %2252, %v2015
          %v2254 = vpop.permute.xlu0 %2253
          %v2256 = vadd.f32 %v2116, %v2159
          %v2257 = vadd.f32 %v2117, %v2159
          %v2258 = vadd.f32 %v2118, %v2164
          %v2259 = vadd.f32 %v2119, %v2164
          %v2260 = vadd.f32 %v2120, %v2169
          %v2261 = vadd.f32 %v2121, %v2169
          %v2262 = vadd.f32 %v2122, %v2174
          %v2263 = vadd.f32 %v2123, %v2174
          %v2264 = vadd.f32 %v2124, %v2179
          %v2265 = vadd.f32 %v2125, %v2179
          %v2266 = vadd.f32 %v2126, %v2184
          %v2267 = vadd.f32 %v2127, %v2184
          %v2268 = vadd.f32 %v2128, %v2189
          %v2269 = vadd.f32 %v2129, %v2189
          %v2270 = vadd.f32 %v2130, %v2194
          %v2271 = vadd.f32 %v2131, %v2194
          %v2272 = vadd.f32 %v2132, %v2199
          %v2273 = vadd.f32 %v2133, %v2199
          %v2274 = vadd.f32 %v2134, %v2204
          %v2275 = vadd.f32 %v2135, %v2204
          %v2276 = vadd.f32 %v2136, %v2209
          %v2277 = vadd.f32 %v2137, %v2209
          %v2278 = vadd.f32 %v2138, %v2214
          %v2279 = vadd.f32 %v2139, %v2214
          %v2280 = vadd.f32 %v2140, %v2219
          %v2281 = vadd.f32 %v2141, %v2219
          %v2282 = vadd.f32 %v2142, %v2224
          %v2283 = vadd.f32 %v2143, %v2224
          %v2284 = vadd.f32 %v2144, %v2229
          %v2285 = vadd.f32 %v2145, %v2229
          %v2286 = vadd.f32 %v2146, %v2234
          %v2287 = vadd.f32 %v2147, %v2234
          %v2288 = vadd.f32 %v2148, %v2239
          %v2289 = vadd.f32 %v2149, %v2239
          %v2290 = vadd.f32 %v2150, %v2244
          %v2291 = vadd.f32 %v2151, %v2244
          %v2292 = vadd.f32 %v2152, %v2249
          %v2293 = vadd.f32 %v2153, %v2249
          %v2294 = vadd.f32 %v2154, %v2254
          %v2295 = vadd.f32 %v2155, %v2254
          %2296 = vst [vmem:[#allocation3] sm:$0xff] %v2256
          %2297 = vst.msk [vmem:[#allocation3 + $0x8] sm:$0xff] %vm1492, %v2257
          %2298 = vst [vmem:[#allocation3 + $0x10] sm:$0xff] %v2258
          %2299 = vst.msk [vmem:[#allocation3 + $0x18] sm:$0xff] %vm1492, %v2259
          %2300 = vst [vmem:[#allocation3 + $0x20] sm:$0xff] %v2260
          %2301 = vst.msk [vmem:[#allocation3 + $0x28] sm:$0xff] %vm1492, %v2261
          %2302 = vst [vmem:[#allocation3 + $0x30] sm:$0xff] %v2262
          %2303 = vst.msk [vmem:[#allocation3 + $0x38] sm:$0xff] %vm1492, %v2263
          %2304 = vst [vmem:[#allocation3 + $0x40] sm:$0xff] %v2264
          %2305 = vst.msk [vmem:[#allocation3 + $0x48] sm:$0xff] %vm1492, %v2265
          %2306 = vst [vmem:[#allocation3 + $0x50] sm:$0xff] %v2266
          %2307 = vst.msk [vmem:[#allocation3 + $0x58] sm:$0xff] %vm1492, %v2267
          %2308 = vst [vmem:[#allocation3 + $0x60] sm:$0xff] %v2268
          %2309 = vst.msk [vmem:[#allocation3 + $0x68] sm:$0xff] %vm1492, %v2269
          %2310 = vst [vmem:[#allocation3 + $0x70] sm:$0xff] %v2270
          %2311 = vst.msk [vmem:[#allocation3 + $0x78] sm:$0xff] %vm1492, %v2271
          %2312 = vst [vmem:[#allocation3 + $0x80] sm:$0xff] %v2272
          %2313 = vst.msk [vmem:[#allocation3 + $0x88] sm:$0xff] %vm1492, %v2273
          %2314 = vst [vmem:[#allocation3 + $0x90] sm:$0xff] %v2274
          %2315 = vst.msk [vmem:[#allocation3 + $0x98] sm:$0xff] %vm1492, %v2275
          %2316 = vst [vmem:[#allocation3 + $0xa0] sm:$0xff] %v2276
          %2317 = vst.msk [vmem:[#allocation3 + $0xa8] sm:$0xff] %vm1492, %v2277
          %2318 = vst [vmem:[#allocation3 + $0xb0] sm:$0xff] %v2278
          %2319 = vst.msk [vmem:[#allocation3 + $0xb8] sm:$0xff] %vm1492, %v2279
          %2320 = vst [vmem:[#allocation3 + $0xc0] sm:$0xff] %v2280
          %2321 = vst.msk [vmem:[#allocation3 + $0xc8] sm:$0xff] %vm1492, %v2281
          %2322 = vst [vmem:[#allocation3 + $0xd0] sm:$0xff] %v2282
          %2323 = vst.msk [vmem:[#allocation3 + $0xd8] sm:$0xff] %vm1492, %v2283
          %2324 = vst [vmem:[#allocation3 + $0xe0] sm:$0xff] %v2284
          %2325 = vst.msk [vmem:[#allocation3 + $0xe8] sm:$0xff] %vm1492, %v2285
          %2326 = vst [vmem:[#allocation3 + $0xf0] sm:$0xff] %v2286
          %2327 = vst.msk [vmem:[#allocation3 + $0xf8] sm:$0xff] %vm1492, %v2287
          %2328 = vst [vmem:[#allocation3 + $0x100] sm:$0xff] %v2288
          %2329 = vst.msk [vmem:[#allocation3 + $0x108] sm:$0xff] %vm1492, %v2289
          %2330 = vst [vmem:[#allocation3 + $0x110] sm:$0xff] %v2290
          %2331 = vst.msk [vmem:[#allocation3 + $0x118] sm:$0xff] %vm1492, %v2291
          %2332 = vst [vmem:[#allocation3 + $0x120] sm:$0xff] %v2292
          %2333 = vst.msk [vmem:[#allocation3 + $0x128] sm:$0xff] %vm1492, %v2293
          %2334 = vst [vmem:[#allocation3 + $0x130] sm:$0xff] %v2294
          %2335 = vst.msk [vmem:[#allocation3 + $0x138] sm:$0xff] %vm1492, %v2295
        $region48: #{tpu_custom_call.1} parent=39 // pred_fallthru
          _
        // Predicated region
        $region49: #{tpu_custom_call.1} parent=39 // pred_check
          %p2336 = pneg %p150
        $region50: #{tpu_custom_call.1} parent=39 // pred_check_branch
          %2338 = sbr.rel (%p2336) target = $region52
        $region51: #{tpu_custom_call.1} parent=39 // pred_region
          %s2340 = ssub.s32 5120, 5120
          %2341 = vsyncadd [#allocation4], %s2340
          %s2342 = sshll.u32 [#allocation3], 4
          %s2343 = int_to_ptr.vmem [resolvable:$true] %s2342
          %2348 = dma.vmem_to_hbm [thread:$0]  %s2343, 5120, %s5, [#allocation4], 256, 256, 16
        $region52: #{tpu_custom_call.1} parent=39 // pred_fallthru
          _
        // Predicated region
        $region53: #{tpu_custom_call.1} parent=39 // pred_check
          %p2349 = pneg %p150
        $region54: #{tpu_custom_call.1} parent=39 // pred_check_branch
          %2351 = sbr.rel (%p2349) target = $region56
        $region55: #{tpu_custom_call.1} parent=39 // pred_region
          %2352 = dma.done [#allocation4], 5120
        $region56: #{tpu_custom_call.1} parent=39 // pred_fallthru
          _
      $region40: #{tpu_custom_call.1} parent=5 // pred_fallthru
        _
      %p2353 = scmp.le.s32.totalorder 2, %s12
      // Predicated region
      $region57: #{tpu_custom_call.1} parent=5 // pred_check
        %p2354 = pneg %p2353
      $region58: #{tpu_custom_call.1} parent=5 // pred_check_branch
        %2356 = sbr.rel (%p2354) target = $region60
      $region59: #{tpu_custom_call.1} parent=5 // pred_region
        %s2357 = ssub.s32 %s12, 2
      $region60: #{tpu_custom_call.1} parent=5 // pred_fallthru
        _
    $region6: #{tpu_custom_call.1} parent=1 // loop_footer
      %s16 = sadd.s32 1, %s12
    $region7: #{tpu_custom_call.1} parent=1 // loop_footer_branch
      %11 = sbr.rel target = $region3
    $region8: #{tpu_custom_call.1} parent=1 // loop_exit
      _
    %2358 = vsyncpa [#allocation4], 1
    %s2359 = scalar_lea.sflag [#allocation4], 1
    %2360 = vsyncpa %s2359, 1

</llo_original>
